<compile_context>
chip_gen: v6e
topology: v6e:2x2x1
jax: 0.10.0
libtpu: 0.0.40
codegen_flags: <defaults>
</compile_context>

<pallas_src>
import functools

import jax
import jax.numpy as jnp
from jax.experimental import pallas as pl
from jax.experimental.pallas import tpu as pltpu

# ----------------------------- configuration --------------------------------
DIM = 32          # embedding dim
N_NODES = 64      # i_nodes == number of graph nodes (embedding table rows)
U_NODES = 32      # u_nodes (unused by the forward math, kept for fidelity)
GRAPH_NUM = 3     # number of knowledge-graph channels
LAYERS = 2        # LGConv propagation layers
BATCH = 8         # number of (user, item) pairs
ATTN_TYPE = "attention"

_VMEM = pl.BlockSpec(memory_space=pltpu.MemorySpace.VMEM)
_SMEM = pl.BlockSpec(memory_space=pltpu.MemorySpace.SMEM)


# ---------------- fused kernel: LGConv + attention + scoring ----------------
def _fused_forward_kernel(user_ref, item_ref, a_ref, x_ref, wa_ref,
                          ls_ref, prod_ref, node_ref,
                          *, graph_num, layers, batch):
    """
    Inputs:
      user_ref, item_ref : SMEM [B] int32   (user/item node indices)
      a_ref              : VMEM [G, N, N]   (normalized adjacencies)
      x_ref              : VMEM [N, D]      (initial node embeddings)
      wa_ref             : VMEM [D, 1]      (precomputed W @ a)
    Outputs:
      ls_ref             : VMEM [G, N, D]   (per-channel LGConv outputs)
      prod_ref           : VMEM [B, D]      (u_emb * i_emb, summed in wrapper)
    Scratch:
      node_ref           : VMEM [N, D]      (attention-fused node embedding)
    """
    x0 = x_ref[...]                     # [N, D]
    wa = wa_ref[...]                    # [D, 1]

    embs, scores = [], []
    for g in range(graph_num):          # static unroll over channels
        a = a_ref[g]                    # [N, N]
        x = x0
        for _ in range(layers):         # static unroll: X <- A_hat @ X
            x = jnp.dot(a, x, preferred_element_type=jnp.float32)
        ls_ref[g] = x                   # per-channel embedding output
        embs.append(x)
        # (E_g @ W) @ a == E_g @ (W @ a): single matvec per channel
        scores.append(jnp.dot(x, wa, preferred_element_type=jnp.float32))  # [N,1]

    # softmax over the channel axis (channel-wise, no 3D reshapes)
    m = scores[0]
    for g in range(1, graph_num):
        m = jnp.maximum(m, scores[g])
    exps = [jnp.exp(s - m) for s in scores]
    denom = exps[0]
    for g in range(1, graph_num):
        denom = denom + exps[g]
    inv = pl.reciprocal(denom, approx=False)     # one recip, G multiplies
    acc = jnp.zeros_like(x0)
    for g in range(graph_num):
        acc = acc + (exps[g] * inv) * embs[g]
    node_ref[...] = acc                 # fused node embedding [N, D]

    # scoring: gather user/item rows in-VMEM, write lane-dense [B, D] products
    for b in range(batch):              # static unroll (B is small)
        u = user_ref[b]
        i = item_ref[b]
        u_row = node_ref[pl.ds(u, 1), :]          # [1, D]
        i_row = node_ref[pl.ds(i, 1), :]          # [1, D]
        prod_ref[pl.ds(b, 1), :] = u_row * i_row


def fused_forward(user, item, a_stack, x0, wa, layers):
    g, n, _ = a_stack.shape
    d = x0.shape[1]
    b = user.shape[0]
    return pl.pallas_call(
        functools.partial(_fused_forward_kernel,
                          graph_num=g, layers=layers, batch=b),
        out_shape=(jax.ShapeDtypeStruct((g, n, d), jnp.float32),
                   jax.ShapeDtypeStruct((b, d), jnp.float32)),
        in_specs=[_SMEM, _SMEM, _VMEM, _VMEM, _VMEM],
        out_specs=(_VMEM, _VMEM),
        scratch_shapes=[pltpu.VMEM((n, d), jnp.float32)],
    )(user.astype(jnp.int32), item.astype(jnp.int32), a_stack, x0, wa)


# ------------------------------ forward --------------------------------------
def metakrec_forward(user, item, graphs, params, attn_type=ATTN_TYPE):
    """graphs: list of (a_hat [N,N], x_ids [N]) tuples (x_ids == arange(N))."""
    g = len(graphs)
    a_stack = jnp.stack([a for a, _ in graphs], axis=0)        # [G, N, N]

    # graph.x is the identity node-id range, so the embedding "gather" is the
    # table itself -- skip G redundant HBM gathers and feed it directly.
    # TODO(synk): for a non-identity graph.x, gather via scalar-prefetch /
    # pl.Element-indexed BlockSpec instead of an XLA gather.
    x0 = params["node_embedding"]                              # [N, D]
    wa = jnp.dot(params["W"], params["a"])                     # [D, 1] exact fold

    ls, prod = fused_forward(user, item, a_stack, x0, wa, LAYERS)
    ls_embedding = [ls[i] for i in range(g)]

    if attn_type == "attention":
        out = jnp.sum(prod, axis=1)                            # [B]
    elif attn_type == "concat":
        node = jnp.concatenate(ls_embedding, axis=-1) @ params["channel_linear"]
        out = jnp.sum(node[user] * node[item], axis=1)
    else:  # mean
        node = jnp.mean(ls, axis=0)
        out = jnp.sum(node[user] * node[item], axis=1)
    return out, ls_embedding


# ------------------------- pure-JAX reference ---------------------------------
def metakrec_reference(user, item, graphs, params, attn_type=ATTN_TYPE):
    ls = []
    for a_hat, x_ids in graphs:
        x = params["node_embedding"][x_ids]
        for _ in range(LAYERS):
            x = a_hat @ x
        ls.append(x)
    if attn_type == "attention":
        e = jnp.stack(ls, axis=-2)                        # [N, G, D]
        t = e @ params["W"]
        s = t @ params["a"]                               # [N, G, 1]
        w = jax.nn.softmax(s, axis=-2)
        node = jnp.sum(w * e, axis=-2)
    elif attn_type == "concat":
        node = jnp.concatenate(ls, axis=-1) @ params["channel_linear"]
    else:
        node = jnp.mean(jnp.stack(ls, axis=0), axis=0)
    return jnp.sum(node[user] * node[item], axis=1), ls


# ------------------------------ setup -----------------------------------------
def make_graph(key, n_nodes, n_edges):
    """Build a symmetric, symmetrically-normalized dense adjacency (LGConv)."""
    k1, k2 = jax.random.split(key)
    src = jax.random.randint(k1, (n_edges,), 0, n_nodes)
    dst = jax.random.randint(k2, (n_edges,), 0, n_nodes)
    adj = jnp.zeros((n_nodes, n_nodes), jnp.float32)
    adj = adj.at[src, dst].set(1.0)
    adj = adj.at[dst, src].set(1.0)
    deg = jnp.sum(adj, axis=1)
    d_inv_sqrt = jnp.where(deg > 0, 1.0 / jnp.sqrt(deg), 0.0)
    a_hat = d_inv_sqrt[:, None] * adj * d_inv_sqrt[None, :]
    x_ids = jnp.arange(n_nodes, dtype=jnp.int32)          # graph.x = node ids
    return a_hat, x_ids


if __name__ == "__main__":
    root = jax.random.PRNGKey(0)
    k_emb, k_w, k_a, k_cl, k_g, k_u, k_i = jax.random.split(root, 7)

    params = {
        "node_embedding": jax.random.normal(k_emb, (N_NODES, DIM), jnp.float32),
        "W": jax.random.normal(k_w, (DIM, DIM), jnp.float32),
        "a": jax.random.normal(k_a, (DIM, 1), jnp.float32),
        "channel_linear": jax.random.normal(k_cl, (DIM * GRAPH_NUM, DIM), jnp.float32),
        # TODO(synk): fc_cl_list Linear layers are instantiated in __init__ but
        # never used in forward(); omitted here.
    }

    graph_keys = jax.random.split(k_g, GRAPH_NUM)
    graphs = [make_graph(graph_keys[g], N_NODES, 200) for g in range(GRAPH_NUM)]

    user = jax.random.randint(k_u, (BATCH,), 0, N_NODES)
    item = jax.random.randint(k_i, (BATCH,), 0, N_NODES)

    out, ls_embedding = metakrec_forward(user, item, graphs, params)
    out = jax.block_until_ready(out)
    for e in ls_embedding:
        jax.block_until_ready(e)

    ref_out, ref_ls = metakrec_reference(user, item, graphs, params)
    assert jnp.allclose(out, ref_out, rtol=1e-4, atol=1e-4), (out, ref_out)
    for e, r in zip(ls_embedding, ref_ls):
        assert jnp.allclose(e, r, rtol=1e-4, atol=1e-4)

    print("KERNEL_OK")
</pallas_src>

<mosaic_0001>
module attributes {stable_mosaic.version = 11 : i64} {
  func.func @_fused_forward_kernel(%arg0: memref<8xi32, #tpu.memory_space<smem>>, %arg1: memref<8xi32, #tpu.memory_space<smem>>, %arg2: memref<3x64x64xf32, #tpu.memory_space<vmem>>, %arg3: memref<64x32xf32, #tpu.memory_space<vmem>>, %arg4: memref<32x1xf32, #tpu.memory_space<vmem>>, %arg5: memref<3x64x32xf32, #tpu.memory_space<vmem>>, %arg6: memref<8x32xf32, #tpu.memory_space<vmem>>, %arg7: memref<64x32xf32, #tpu.memory_space<vmem>>) attributes {dimension_semantics = [], scalar_prefetch = 0 : i64, scratch_operands = 1 : i64, tpu.core_type = #tpu.core_type<tc>} {
    %c0 = arith.constant 0 : index
    %c0_0 = arith.constant 0 : index
    %0 = vector.load %arg3[%c0, %c0_0] : memref<64x32xf32, #tpu.memory_space<vmem>>, vector<64x32xf32>
    %c0_1 = arith.constant 0 : index
    %c0_2 = arith.constant 0 : index
    %1 = vector.load %arg4[%c0_1, %c0_2] : memref<32x1xf32, #tpu.memory_space<vmem>>, vector<32x1xf32>
    %c0_3 = arith.constant 0 : index
    %c0_4 = arith.constant 0 : index
    %c0_5 = arith.constant 0 : index
    %2 = vector.load %arg2[%c0_3, %c0_4, %c0_5] : memref<3x64x64xf32, #tpu.memory_space<vmem>>, vector<1x64x64xf32>
    %3 = vector.shape_cast %2 : vector<1x64x64xf32> to vector<64x64xf32>
    %cst = arith.constant dense<0.000000e+00> : vector<64x32xf32>
    %4 = tpu.matmul %3, %0, %cst {dimension_numbers = #tpu.dot_dimension_numbers<[1], [0], [0], [1], [0, 0, 1, 1], [], []>} : vector<64x64xf32>, vector<64x32xf32>, vector<64x32xf32> -> vector<64x32xf32>
    %cst_6 = arith.constant dense<0.000000e+00> : vector<64x32xf32>
    %5 = tpu.matmul %3, %4, %cst_6 {dimension_numbers = #tpu.dot_dimension_numbers<[1], [0], [0], [1], [0, 0, 1, 1], [], []>} : vector<64x64xf32>, vector<64x32xf32>, vector<64x32xf32> -> vector<64x32xf32>
    %c0_7 = arith.constant 0 : index
    %c0_8 = arith.constant 0 : index
    %c0_9 = arith.constant 0 : index
    %6 = vector.load %arg5[%c0_7, %c0_8, %c0_9] : memref<3x64x32xf32, #tpu.memory_space<vmem>>, vector<1x64x32xf32>
    %7 = vector.shape_cast %6 : vector<1x64x32xf32> to vector<64x32xf32>
    %8 = vector.shape_cast %5 : vector<64x32xf32> to vector<1x64x32xf32>
    tpu.vector_store %arg5[%c0_7, %c0_8, %c0_9], %8 {strides = array<i32>} : memref<3x64x32xf32, #tpu.memory_space<vmem>>, vector<1x64x32xf32>,
    %cst_10 = arith.constant dense<0.000000e+00> : vector<64x1xf32>
    %9 = tpu.matmul %5, %1, %cst_10 {dimension_numbers = #tpu.dot_dimension_numbers<[1], [0], [0], [1], [0, 0, 1, 1], [], []>} : vector<64x32xf32>, vector<32x1xf32>, vector<64x1xf32> -> vector<64x1xf32>
    %c1 = arith.constant 1 : index
    %c0_11 = arith.constant 0 : index
    %c0_12 = arith.constant 0 : index
    %10 = vector.load %arg2[%c1, %c0_11, %c0_12] : memref<3x64x64xf32, #tpu.memory_space<vmem>>, vector<1x64x64xf32>
    %11 = vector.shape_cast %10 : vector<1x64x64xf32> to vector<64x64xf32>
    %cst_13 = arith.constant dense<0.000000e+00> : vector<64x32xf32>
    %12 = tpu.matmul %11, %0, %cst_13 {dimension_numbers = #tpu.dot_dimension_numbers<[1], [0], [0], [1], [0, 0, 1, 1], [], []>} : vector<64x64xf32>, vector<64x32xf32>, vector<64x32xf32> -> vector<64x32xf32>
    %cst_14 = arith.constant dense<0.000000e+00> : vector<64x32xf32>
    %13 = tpu.matmul %11, %12, %cst_14 {dimension_numbers = #tpu.dot_dimension_numbers<[1], [0], [0], [1], [0, 0, 1, 1], [], []>} : vector<64x64xf32>, vector<64x32xf32>, vector<64x32xf32> -> vector<64x32xf32>
    %c1_15 = arith.constant 1 : index
    %c0_16 = arith.constant 0 : index
    %c0_17 = arith.constant 0 : index
    %14 = vector.load %arg5[%c1_15, %c0_16, %c0_17] : memref<3x64x32xf32, #tpu.memory_space<vmem>>, vector<1x64x32xf32>
    %15 = vector.shape_cast %14 : vector<1x64x32xf32> to vector<64x32xf32>
    %16 = vector.shape_cast %13 : vector<64x32xf32> to vector<1x64x32xf32>
    tpu.vector_store %arg5[%c1_15, %c0_16, %c0_17], %16 {strides = array<i32>} : memref<3x64x32xf32, #tpu.memory_space<vmem>>, vector<1x64x32xf32>,
    %cst_18 = arith.constant dense<0.000000e+00> : vector<64x1xf32>
    %17 = tpu.matmul %13, %1, %cst_18 {dimension_numbers = #tpu.dot_dimension_numbers<[1], [0], [0], [1], [0, 0, 1, 1], [], []>} : vector<64x32xf32>, vector<32x1xf32>, vector<64x1xf32> -> vector<64x1xf32>
    %c2 = arith.constant 2 : index
    %c0_19 = arith.constant 0 : index
    %c0_20 = arith.constant 0 : index
    %18 = vector.load %arg2[%c2, %c0_19, %c0_20] : memref<3x64x64xf32, #tpu.memory_space<vmem>>, vector<1x64x64xf32>
    %19 = vector.shape_cast %18 : vector<1x64x64xf32> to vector<64x64xf32>
    %cst_21 = arith.constant dense<0.000000e+00> : vector<64x32xf32>
    %20 = tpu.matmul %19, %0, %cst_21 {dimension_numbers = #tpu.dot_dimension_numbers<[1], [0], [0], [1], [0, 0, 1, 1], [], []>} : vector<64x64xf32>, vector<64x32xf32>, vector<64x32xf32> -> vector<64x32xf32>
    %cst_22 = arith.constant dense<0.000000e+00> : vector<64x32xf32>
    %21 = tpu.matmul %19, %20, %cst_22 {dimension_numbers = #tpu.dot_dimension_numbers<[1], [0], [0], [1], [0, 0, 1, 1], [], []>} : vector<64x64xf32>, vector<64x32xf32>, vector<64x32xf32> -> vector<64x32xf32>
    %c2_23 = arith.constant 2 : index
    %c0_24 = arith.constant 0 : index
    %c0_25 = arith.constant 0 : index
    %22 = vector.load %arg5[%c2_23, %c0_24, %c0_25] : memref<3x64x32xf32, #tpu.memory_space<vmem>>, vector<1x64x32xf32>
    %23 = vector.shape_cast %22 : vector<1x64x32xf32> to vector<64x32xf32>
    %24 = vector.shape_cast %21 : vector<64x32xf32> to vector<1x64x32xf32>
    tpu.vector_store %arg5[%c2_23, %c0_24, %c0_25], %24 {strides = array<i32>} : memref<3x64x32xf32, #tpu.memory_space<vmem>>, vector<1x64x32xf32>,
    %cst_26 = arith.constant dense<0.000000e+00> : vector<64x1xf32>
    %25 = tpu.matmul %21, %1, %cst_26 {dimension_numbers = #tpu.dot_dimension_numbers<[1], [0], [0], [1], [0, 0, 1, 1], [], []>} : vector<64x32xf32>, vector<32x1xf32>, vector<64x1xf32> -> vector<64x1xf32>
    %26 = arith.maximumf %9, %17 : vector<64x1xf32>
    %27 = arith.maximumf %26, %25 : vector<64x1xf32>
    %28 = arith.subf %9, %27 : vector<64x1xf32>
    %29 = math.exp %28 : vector<64x1xf32>
    %30 = arith.subf %17, %27 : vector<64x1xf32>
    %31 = math.exp %30 : vector<64x1xf32>
    %32 = arith.subf %25, %27 : vector<64x1xf32>
    %33 = math.exp %32 : vector<64x1xf32>
    %34 = arith.addf %29, %31 : vector<64x1xf32>
    %35 = arith.addf %34, %33 : vector<64x1xf32>
    %36 = tpu.reciprocal %35 : vector<64x1xf32> -> vector<64x1xf32>
    %cst_27 = arith.constant 0.000000e+00 : f32
    %37 = vector.broadcast %cst_27 : f32 to vector<64x32xf32>
    %38 = arith.mulf %29, %36 : vector<64x1xf32>
    %39 = vector.broadcast %38 : vector<64x1xf32> to vector<64x32xf32>
    %40 = arith.mulf %39, %5 : vector<64x32xf32>
    %41 = arith.addf %37, %40 : vector<64x32xf32>
    %42 = arith.mulf %31, %36 : vector<64x1xf32>
    %43 = vector.broadcast %42 : vector<64x1xf32> to vector<64x32xf32>
    %44 = arith.mulf %43, %13 : vector<64x32xf32>
    %45 = arith.addf %41, %44 : vector<64x32xf32>
    %46 = arith.mulf %33, %36 : vector<64x1xf32>
    %47 = vector.broadcast %46 : vector<64x1xf32> to vector<64x32xf32>
    %48 = arith.mulf %47, %21 : vector<64x32xf32>
    %49 = arith.addf %45, %48 : vector<64x32xf32>
    %c0_28 = arith.constant 0 : index
    %c0_29 = arith.constant 0 : index
    %50 = vector.load %arg7[%c0_28, %c0_29] : memref<64x32xf32, #tpu.memory_space<vmem>>, vector<64x32xf32>
    tpu.vector_store %arg7[%c0_28, %c0_29], %49 {strides = array<i32>} : memref<64x32xf32, #tpu.memory_space<vmem>>, vector<64x32xf32>,
    %c0_30 = arith.constant 0 : index
    %51 = memref.load %arg0[%c0_30] : memref<8xi32, #tpu.memory_space<smem>>
    %c0_31 = arith.constant 0 : index
    %52 = memref.load %arg1[%c0_31] : memref<8xi32, #tpu.memory_space<smem>>
    %53 = arith.index_cast %51 : i32 to index
    %c0_32 = arith.constant 0 : index
    %54 = vector.load %arg7[%53, %c0_32] : memref<64x32xf32, #tpu.memory_space<vmem>>, vector<1x32xf32>
    %55 = arith.index_cast %52 : i32 to index
    %c0_33 = arith.constant 0 : index
    %56 = vector.load %arg7[%55, %c0_33] : memref<64x32xf32, #tpu.memory_space<vmem>>, vector<1x32xf32>
    %57 = arith.mulf %54, %56 : vector<1x32xf32>
    %c0_34 = arith.constant 0 : index
    %c0_35 = arith.constant 0 : index
    %58 = vector.load %arg6[%c0_34, %c0_35] : memref<8x32xf32, #tpu.memory_space<vmem>>, vector<1x32xf32>
    tpu.vector_store %arg6[%c0_34, %c0_35], %57 {strides = array<i32>} : memref<8x32xf32, #tpu.memory_space<vmem>>, vector<1x32xf32>,
    %c1_36 = arith.constant 1 : index
    %59 = memref.load %arg0[%c1_36] : memref<8xi32, #tpu.memory_space<smem>>
    %c1_37 = arith.constant 1 : index
    %60 = memref.load %arg1[%c1_37] : memref<8xi32, #tpu.memory_space<smem>>
    %61 = arith.index_cast %59 : i32 to index
    %c0_38 = arith.constant 0 : index
    %62 = vector.load %arg7[%61, %c0_38] : memref<64x32xf32, #tpu.memory_space<vmem>>, vector<1x32xf32>
    %63 = arith.index_cast %60 : i32 to index
    %c0_39 = arith.constant 0 : index
    %64 = vector.load %arg7[%63, %c0_39] : memref<64x32xf32, #tpu.memory_space<vmem>>, vector<1x32xf32>
    %65 = arith.mulf %62, %64 : vector<1x32xf32>
    %c1_40 = arith.constant 1 : index
    %c0_41 = arith.constant 0 : index
    %66 = vector.load %arg6[%c1_40, %c0_41] : memref<8x32xf32, #tpu.memory_space<vmem>>, vector<1x32xf32>
    tpu.vector_store %arg6[%c1_40, %c0_41], %65 {strides = array<i32>} : memref<8x32xf32, #tpu.memory_space<vmem>>, vector<1x32xf32>,
    %c2_42 = arith.constant 2 : index
    %67 = memref.load %arg0[%c2_42] : memref<8xi32, #tpu.memory_space<smem>>
    %c2_43 = arith.constant 2 : index
    %68 = memref.load %arg1[%c2_43] : memref<8xi32, #tpu.memory_space<smem>>
    %69 = arith.index_cast %67 : i32 to index
    %c0_44 = arith.constant 0 : index
    %70 = vector.load %arg7[%69, %c0_44] : memref<64x32xf32, #tpu.memory_space<vmem>>, vector<1x32xf32>
    %71 = arith.index_cast %68 : i32 to index
    %c0_45 = arith.constant 0 : index
    %72 = vector.load %arg7[%71, %c0_45] : memref<64x32xf32, #tpu.memory_space<vmem>>, vector<1x32xf32>
    %73 = arith.mulf %70, %72 : vector<1x32xf32>
    %c2_46 = arith.constant 2 : index
    %c0_47 = arith.constant 0 : index
    %74 = vector.load %arg6[%c2_46, %c0_47] : memref<8x32xf32, #tpu.memory_space<vmem>>, vector<1x32xf32>
    tpu.vector_store %arg6[%c2_46, %c0_47], %73 {strides = array<i32>} : memref<8x32xf32, #tpu.memory_space<vmem>>, vector<1x32xf32>,
    %c3 = arith.constant 3 : index
    %75 = memref.load %arg0[%c3] : memref<8xi32, #tpu.memory_space<smem>>
    %c3_48 = arith.constant 3 : index
    %76 = memref.load %arg1[%c3_48] : memref<8xi32, #tpu.memory_space<smem>>
    %77 = arith.index_cast %75 : i32 to index
    %c0_49 = arith.constant 0 : index
    %78 = vector.load %arg7[%77, %c0_49] : memref<64x32xf32, #tpu.memory_space<vmem>>, vector<1x32xf32>
    %79 = arith.index_cast %76 : i32 to index
    %c0_50 = arith.constant 0 : index
    %80 = vector.load %arg7[%79, %c0_50] : memref<64x32xf32, #tpu.memory_space<vmem>>, vector<1x32xf32>
    %81 = arith.mulf %78, %80 : vector<1x32xf32>
    %c3_51 = arith.constant 3 : index
    %c0_52 = arith.constant 0 : index
    %82 = vector.load %arg6[%c3_51, %c0_52] : memref<8x32xf32, #tpu.memory_space<vmem>>, vector<1x32xf32>
    tpu.vector_store %arg6[%c3_51, %c0_52], %81 {strides = array<i32>} : memref<8x32xf32, #tpu.memory_space<vmem>>, vector<1x32xf32>,
    %c4 = arith.constant 4 : index
    %83 = memref.load %arg0[%c4] : memref<8xi32, #tpu.memory_space<smem>>
    %c4_53 = arith.constant 4 : index
    %84 = memref.load %arg1[%c4_53] : memref<8xi32, #tpu.memory_space<smem>>
    %85 = arith.index_cast %83 : i32 to index
    %c0_54 = arith.constant 0 : index
    %86 = vector.load %arg7[%85, %c0_54] : memref<64x32xf32, #tpu.memory_space<vmem>>, vector<1x32xf32>
    %87 = arith.index_cast %84 : i32 to index
    %c0_55 = arith.constant 0 : index
    %88 = vector.load %arg7[%87, %c0_55] : memref<64x32xf32, #tpu.memory_space<vmem>>, vector<1x32xf32>
    %89 = arith.mulf %86, %88 : vector<1x32xf32>
    %c4_56 = arith.constant 4 : index
    %c0_57 = arith.constant 0 : index
    %90 = vector.load %arg6[%c4_56, %c0_57] : memref<8x32xf32, #tpu.memory_space<vmem>>, vector<1x32xf32>
    tpu.vector_store %arg6[%c4_56, %c0_57], %89 {strides = array<i32>} : memref<8x32xf32, #tpu.memory_space<vmem>>, vector<1x32xf32>,
    %c5 = arith.constant 5 : index
    %91 = memref.load %arg0[%c5] : memref<8xi32, #tpu.memory_space<smem>>
    %c5_58 = arith.constant 5 : index
    %92 = memref.load %arg1[%c5_58] : memref<8xi32, #tpu.memory_space<smem>>
    %93 = arith.index_cast %91 : i32 to index
    %c0_59 = arith.constant 0 : index
    %94 = vector.load %arg7[%93, %c0_59] : memref<64x32xf32, #tpu.memory_space<vmem>>, vector<1x32xf32>
    %95 = arith.index_cast %92 : i32 to index
    %c0_60 = arith.constant 0 : index
    %96 = vector.load %arg7[%95, %c0_60] : memref<64x32xf32, #tpu.memory_space<vmem>>, vector<1x32xf32>
    %97 = arith.mulf %94, %96 : vector<1x32xf32>
    %c5_61 = arith.constant 5 : index
    %c0_62 = arith.constant 0 : index
    %98 = vector.load %arg6[%c5_61, %c0_62] : memref<8x32xf32, #tpu.memory_space<vmem>>, vector<1x32xf32>
    tpu.vector_store %arg6[%c5_61, %c0_62], %97 {strides = array<i32>} : memref<8x32xf32, #tpu.memory_space<vmem>>, vector<1x32xf32>,
    %c6 = arith.constant 6 : index
    %99 = memref.load %arg0[%c6] : memref<8xi32, #tpu.memory_space<smem>>
    %c6_63 = arith.constant 6 : index
    %100 = memref.load %arg1[%c6_63] : memref<8xi32, #tpu.memory_space<smem>>
    %101 = arith.index_cast %99 : i32 to index
    %c0_64 = arith.constant 0 : index
    %102 = vector.load %arg7[%101, %c0_64] : memref<64x32xf32, #tpu.memory_space<vmem>>, vector<1x32xf32>
    %103 = arith.index_cast %100 : i32 to index
    %c0_65 = arith.constant 0 : index
    %104 = vector.load %arg7[%103, %c0_65] : memref<64x32xf32, #tpu.memory_space<vmem>>, vector<1x32xf32>
    %105 = arith.mulf %102, %104 : vector<1x32xf32>
    %c6_66 = arith.constant 6 : index
    %c0_67 = arith.constant 0 : index
    %106 = vector.load %arg6[%c6_66, %c0_67] : memref<8x32xf32, #tpu.memory_space<vmem>>, vector<1x32xf32>
    tpu.vector_store %arg6[%c6_66, %c0_67], %105 {strides = array<i32>} : memref<8x32xf32, #tpu.memory_space<vmem>>, vector<1x32xf32>,
    %c7 = arith.constant 7 : index
    %107 = memref.load %arg0[%c7] : memref<8xi32, #tpu.memory_space<smem>>
    %c7_68 = arith.constant 7 : index
    %108 = memref.load %arg1[%c7_68] : memref<8xi32, #tpu.memory_space<smem>>
    %109 = arith.index_cast %107 : i32 to index
    %c0_69 = arith.constant 0 : index
    %110 = vector.load %arg7[%109, %c0_69] : memref<64x32xf32, #tpu.memory_space<vmem>>, vector<1x32xf32>
    %111 = arith.index_cast %108 : i32 to index
    %c0_70 = arith.constant 0 : index
    %112 = vector.load %arg7[%111, %c0_70] : memref<64x32xf32, #tpu.memory_space<vmem>>, vector<1x32xf32>
    %113 = arith.mulf %110, %112 : vector<1x32xf32>
    %c7_71 = arith.constant 7 : index
    %c0_72 = arith.constant 0 : index
    %114 = vector.load %arg6[%c7_71, %c0_72] : memref<8x32xf32, #tpu.memory_space<vmem>>, vector<1x32xf32>
    tpu.vector_store %arg6[%c7_71, %c0_72], %113 {strides = array<i32>} : memref<8x32xf32, #tpu.memory_space<vmem>>, vector<1x32xf32>,
    return
  }
}

</mosaic_0001>

<llo_original>
// kernel: tpu_custom_call.1
$region0: #{tpu_custom_call.1}
  #allocation0 [shape = 'u32[]', space=smem, size = 0x4, offset = 0x4, fixed_abs, tag = 'smem constant byte address 0x4 - core index']
  #allocation1 [shape = 'u32[144,128]{1,0:T(1,128)}', space=vmem, size = 0x12000, scoped, tag = 'internal scratch']
  #allocation2 [shape = 'f32[64,32]{1,0:T(8,128)}', space=vmem, size = 0x8000, scoped, tag = 'scratch operand']
  %s0 = inlined_call_operand.vmem [shape: s32[8], index: 0, kind: input, shape index: {}]
  %s1 = inlined_call_operand.vmem [shape: s32[8], index: 1, kind: input, shape index: {}]
  %s2 = inlined_call_operand.hbm [shape: f32[3,64,64], index: 2, kind: input, shape index: {}]
  %s3 = inlined_call_operand.vmem [shape: f32[64,32], index: 3, kind: input, shape index: {}]
  %s4 = inlined_call_operand.vmem [shape: f32[32,1], index: 4, kind: input, shape index: {}]
  %s5 = inlined_call_operand.vmem [shape: f32[3,64,32], index: 5, kind: output, shape index: {0}]
  %s6 = inlined_call_operand.hbm [shape: f32[8,32], index: 6, kind: output, shape index: {1}]
  %7 = xla_tuple %s5, %s6
  %s8 = sld [smem:[#allocation0]]
  $region50: #{tpu_custom_call.1} parent=0
    _
  %s10 = ssub.s32 1, %s8
  %s11 = scalar_select 0, %s10, %s8
  $region1: #{tpu_custom_call.1} parent=0
    #allocation3 [shape = 'u8[512]{0}', space=smem, size = 0x200, scoped, tag = 'input window, operand 0, single buffered']
    #allocation4 [shape = 's32[1]{0}', space=sflag, size = 0x4, scoped, tag = 'scoped memory for tpu_custom_call.1']
    #allocation5 [shape = 's32[1]{0}', space=sflag, size = 0x4, scoped, tag = 'scoped memory for tpu_custom_call.1']
    #allocation6 [shape = 's32[1]{0}', space=sflag, size = 0x4, scoped, tag = 'scoped memory for tpu_custom_call.1']
    #allocation7 [shape = 'u8[512]{0}', space=smem, size = 0x200, scoped, tag = 'input window, operand 1, single buffered']
    #allocation8 [shape = 's32[1]{0}', space=sflag, size = 0x4, scoped, tag = 'scoped memory for tpu_custom_call.1']
    #allocation9 [shape = 'u8[98304]{0}', space=vmem, size = 0x18000, scoped, tag = 'input window, operand 2, single buffered']
    #allocation10 [shape = 'u8[4096]{0}', space=vmem, size = 0x1000, scoped, tag = 'output window, operand 1, single buffered']
    %12 = vsyncpa [#allocation6], 0
    %13 = vsyncpa [#allocation8], 0
    %14 = vsyncpa [#allocation4], 0
    %15 = vsyncpa [#allocation5], 0
    // Predicated region
    $region2: #{tpu_custom_call.1} parent=1 // pred_check
      _
    $region3: #{tpu_custom_call.1} parent=1 // pred_check_branch
      %17 = sbr.rel (0) target = $region5
    $region4: #{tpu_custom_call.1} parent=1 // pred_region
      %s19 = ssub.s32 16, 16
      %20 = vsyncadd [#allocation6], %s19
      %s22 = sshll.u32 %s0, 4
      %s23 = int_to_ptr.vmem [resolvable:$true] %s22
      %25 = dma.vmem_to_smem %s23, 16, [#allocation3], [#allocation6]
    $region5: #{tpu_custom_call.1} parent=1 // pred_fallthru
      _
    // Predicated region
    $region6: #{tpu_custom_call.1} parent=1 // pred_check
      _
    $region7: #{tpu_custom_call.1} parent=1 // pred_check_branch
      %27 = sbr.rel (0) target = $region9
    $region8: #{tpu_custom_call.1} parent=1 // pred_region
      %s29 = ssub.s32 16, 16
      %30 = vsyncadd [#allocation8], %s29
      %s32 = sshll.u32 %s1, 4
      %s33 = int_to_ptr.vmem [resolvable:$true] %s32
      %35 = dma.vmem_to_smem %s33, 16, [#allocation7], [#allocation8]
    $region9: #{tpu_custom_call.1} parent=1 // pred_fallthru
      _
    // Predicated region
    $region10: #{tpu_custom_call.1} parent=1 // pred_check
      _
    $region11: #{tpu_custom_call.1} parent=1 // pred_check_branch
      %37 = sbr.rel (0) target = $region13
    $region12: #{tpu_custom_call.1} parent=1 // pred_region
      %s39 = ssub.s32 3072, 3072
      %40 = vsyncadd [#allocation4], %s39
      %s41 = sshll.u32 [#allocation9], 4
      %s42 = int_to_ptr.vmem [resolvable:$true] %s41
      %47 = dma.hbm_to_vmem [thread:$0]  %s2, 3072, %s42, [#allocation4], 128, 128, 8
    $region13: #{tpu_custom_call.1} parent=1 // pred_fallthru
      _
    // Predicated region
    $region14: #{tpu_custom_call.1} parent=1 // pred_check
      _
    $region15: #{tpu_custom_call.1} parent=1 // pred_check_branch
      %49 = sbr.rel (0) target = $region17
    $region16: #{tpu_custom_call.1} parent=1 // pred_region
      _
    $region17: #{tpu_custom_call.1} parent=1 // pred_fallthru
      _
    // Predicated region
    $region18: #{tpu_custom_call.1} parent=1 // pred_check
      _
    $region19: #{tpu_custom_call.1} parent=1 // pred_check_branch
      %51 = sbr.rel (0) target = $region21
    $region20: #{tpu_custom_call.1} parent=1 // pred_region
      _
    $region21: #{tpu_custom_call.1} parent=1 // pred_fallthru
      _
    // Predicated region
    $region22: #{tpu_custom_call.1} parent=1 // pred_check
      _
    $region23: #{tpu_custom_call.1} parent=1 // pred_check_branch
      %53 = sbr.rel (0) target = $region25
    $region24: #{tpu_custom_call.1} parent=1 // pred_region
      %54 = dma.done [#allocation6], 16
    $region25: #{tpu_custom_call.1} parent=1 // pred_fallthru
      _
    // Predicated region
    $region26: #{tpu_custom_call.1} parent=1 // pred_check
      _
    $region27: #{tpu_custom_call.1} parent=1 // pred_check_branch
      %56 = sbr.rel (0) target = $region29
    $region28: #{tpu_custom_call.1} parent=1 // pred_region
      %57 = dma.done [#allocation8], 16
    $region29: #{tpu_custom_call.1} parent=1 // pred_fallthru
      _
    // Predicated region
    $region30: #{tpu_custom_call.1} parent=1 // pred_check
      _
    $region31: #{tpu_custom_call.1} parent=1 // pred_check_branch
      %59 = sbr.rel (0) target = $region33
    $region32: #{tpu_custom_call.1} parent=1 // pred_region
      %60 = dma.done [#allocation4], 3072
    $region33: #{tpu_custom_call.1} parent=1 // pred_fallthru
      _
    %61 = sfence
    %v62 = vld [vmem:[%s3] sm:$0xff]
    %v63 = vld [vmem:[%s3 + $0x8] sm:$0xff]
    %v64 = vld [vmem:[%s3 + $0x10] sm:$0xff]
    %v65 = vld [vmem:[%s3 + $0x18] sm:$0xff]
    %v66 = vld [vmem:[%s3 + $0x20] sm:$0xff]
    %v67 = vld [vmem:[%s3 + $0x28] sm:$0xff]
    %v68 = vld [vmem:[%s3 + $0x30] sm:$0xff]
    %v69 = vld [vmem:[%s3 + $0x38] sm:$0xff]
    %v70 = vld [vmem:[%s4] sm:$0xff]
    %v71 = vld [vmem:[%s4 + $0x8] sm:$0xff]
    %v72 = vld [vmem:[%s4 + $0x10] sm:$0xff]
    %v73 = vld [vmem:[%s4 + $0x18] sm:$0xff]
    %v74 = vld [vmem:[#allocation9] sm:$0xff]
    %v75 = vld [vmem:[#allocation9 + $0x8] sm:$0xff]
    %v76 = vld [vmem:[#allocation9 + $0x10] sm:$0xff]
    %v77 = vld [vmem:[#allocation9 + $0x18] sm:$0xff]
    %v78 = vld [vmem:[#allocation9 + $0x20] sm:$0xff]
    %v79 = vld [vmem:[#allocation9 + $0x28] sm:$0xff]
    %v80 = vld [vmem:[#allocation9 + $0x30] sm:$0xff]
    %v81 = vld [vmem:[#allocation9 + $0x38] sm:$0xff]
    %vm82 = vcmask 523264
    %v84 = vsel %vm82, %v74, 0
    %v87 = vsel %vm82, %v75, 0
    %v90 = vsel %vm82, %v76, 0
    %v93 = vsel %vm82, %v77, 0
    %v96 = vsel %vm82, %v78, 0
    %v99 = vsel %vm82, %v79, 0
    %v102 = vsel %vm82, %v80, 0
    %v105 = vsel %vm82, %v81, 0
    %107 = vmatprep.subr.mxu0 0.0
    %108 = vmatpush1.msra.mxu0 0.0
    %109 = vmatprep.subr.mxu0 0.0
    %110 = vmatpush1.msra.mxu0 0.0
    %111 = vmatprep.subr.mxu0 0.0
    %112 = vmatpush1.msra.mxu0 0.0
    %113 = vmatprep.subr.mxu0 0.0
    %114 = vmatpush1.msra.mxu0 0.0
    %115 = vmatprep.subr.mxu0 0.0
    %116 = vmatpush1.msra.mxu0 0.0
    %117 = vmatprep.subr.mxu0 0.0
    %118 = vmatpush1.msra.mxu0 0.0
    %119 = vmatprep.subr.mxu0 0.0
    %120 = vmatpush1.msra.mxu0 0.0
    %121 = vmatprep.subr.mxu0 0.0
    %122 = vmatpush1.msra.mxu0 0.0
    %123 = vmatprep.subr.mxu0 0.0
    %124 = vmatpush1.msra.mxu0 %v69
    %125 = vmatprep.subr.mxu0 0.0
    %126 = vmatpush1.msra.mxu0 %v68
    %127 = vmatprep.subr.mxu0 0.0
    %128 = vmatpush1.msra.mxu0 %v67
    %129 = vmatprep.subr.mxu0 0.0
    %130 = vmatpush1.msra.mxu0 %v66
    %131 = vmatprep.subr.mxu0 0.0
    %132 = vmatpush1.msra.mxu0 %v65
    %133 = vmatprep.subr.mxu0 0.0
    %134 = vmatpush1.msra.mxu0 %v64
    %135 = vmatprep.subr.mxu0 0.0
    %136 = vmatpush1.msra.mxu0 %v63
    %137 = vmatprep.subr.mxu0 0.0
    %138 = vmatpush1.msra.mxu0 %v62
    %139 = vmatprep.subr.mxu0 0.0
    %140 = vmatpush2.msra.mxu0 0.0
    %141 = vmatprep.subr.mxu0 0.0
    %142 = vmatpush2.msra.mxu0 0.0
    %143 = vmatprep.subr.mxu0 0.0
    %144 = vmatpush2.msra.mxu0 0.0
    %145 = vmatprep.subr.mxu0 0.0
    %146 = vmatpush2.msra.mxu0 0.0
    %147 = vmatprep.subr.mxu0 0.0
    %148 = vmatpush2.msra.mxu0 0.0
    %149 = vmatprep.subr.mxu0 0.0
    %150 = vmatpush2.msra.mxu0 0.0
    %151 = vmatprep.subr.mxu0 0.0
    %152 = vmatpush2.msra.mxu0 0.0
    %153 = vmatprep.subr.mxu0 0.0
    %154 = vmatpush2.msra.mxu0 0.0
    %155 = vmatprep.subr.mxu0 0.0
    %156 = vmatpush2.msra.mxu0 0.0
    %157 = vmatprep.subr.mxu0 0.0
    %158 = vmatpush2.msra.mxu0 0.0
    %159 = vmatprep.subr.mxu0 0.0
    %160 = vmatpush2.msra.mxu0 0.0
    %161 = vmatprep.subr.mxu0 0.0
    %162 = vmatpush2.msra.mxu0 0.0
    %163 = vmatprep.subr.mxu0 0.0
    %164 = vmatpush2.msra.mxu0 0.0
    %165 = vmatprep.subr.mxu0 0.0
    %166 = vmatpush2.msra.mxu0 0.0
    %167 = vmatprep.subr.mxu0 0.0
    %168 = vmatpush2.msra.mxu0 0.0
    %169 = vmatprep.subr.mxu0 0.0
    %170 = vmatpush2.msra.mxu0 0.0
    %171 = vmatprep.mubr.f32.mxu0 0.0
    %172 = vmatmul.mubr.f32.gmra.mxu0 %v84
    %v173 = vpop.f32.mrf.mxu0
    %v174 = vadd.f32 0.0, %v173
    %v175 = vpop.f32.mrf.mxu0
    %176 = vmatprep.mubr.f32.mxu0 0.0
    %177 = vmatmul.mubr.f32.gmra.mxu0 %v87
    %v178 = vpop.f32.mrf.mxu0
    %v179 = vadd.f32 0.0, %v178
    %v180 = vpop.f32.mrf.mxu0
    %181 = vmatprep.mubr.f32.mxu0 0.0
    %182 = vmatmul.mubr.f32.gmra.mxu0 %v90
    %v183 = vpop.f32.mrf.mxu0
    %v184 = vadd.f32 0.0, %v183
    %v185 = vpop.f32.mrf.mxu0
    %186 = vmatprep.mubr.f32.mxu0 0.0
    %187 = vmatmul.mubr.f32.gmra.mxu0 %v93
    %v188 = vpop.f32.mrf.mxu0
    %v189 = vadd.f32 0.0, %v188
    %v190 = vpop.f32.mrf.mxu0
    %191 = vmatprep.mubr.f32.mxu0 0.0
    %192 = vmatmul.mubr.f32.gmra.mxu0 %v96
    %v193 = vpop.f32.mrf.mxu0
    %v194 = vadd.f32 0.0, %v193
    %v195 = vpop.f32.mrf.mxu0
    %196 = vmatprep.mubr.f32.mxu0 0.0
    %197 = vmatmul.mubr.f32.gmra.mxu0 %v99
    %v198 = vpop.f32.mrf.mxu0
    %v199 = vadd.f32 0.0, %v198
    %v200 = vpop.f32.mrf.mxu0
    %201 = vmatprep.mubr.f32.mxu0 0.0
    %202 = vmatmul.mubr.f32.gmra.mxu0 %v102
    %v203 = vpop.f32.mrf.mxu0
    %v204 = vadd.f32 0.0, %v203
    %v205 = vpop.f32.mrf.mxu0
    %206 = vmatprep.mubr.f32.mxu0 0.0
    %207 = vmatmul.mubr.f32.gmra.mxu0 %v105
    %v208 = vpop.f32.mrf.mxu0
    %v209 = vadd.f32 0.0, %v208
    %v210 = vpop.f32.mrf.mxu0
    %211 = vdwg.mxu0
    %212 = vmatprep.subr.mxu0 0.0
    %213 = vmatpush1.msra.mxu0 0.0
    %214 = vmatprep.subr.mxu0 0.0
    %215 = vmatpush1.msra.mxu0 0.0
    %216 = vmatprep.subr.mxu0 0.0
    %217 = vmatpush1.msra.mxu0 0.0
    %218 = vmatprep.subr.mxu0 0.0
    %219 = vmatpush1.msra.mxu0 0.0
    %220 = vmatprep.subr.mxu0 0.0
    %221 = vmatpush1.msra.mxu0 0.0
    %222 = vmatprep.subr.mxu0 0.0
    %223 = vmatpush1.msra.mxu0 0.0
    %224 = vmatprep.subr.mxu0 0.0
    %225 = vmatpush1.msra.mxu0 0.0
    %226 = vmatprep.subr.mxu0 0.0
    %227 = vmatpush1.msra.mxu0 0.0
    %228 = vmatprep.subr.mxu0 0.0
    %229 = vmatpush1.msra.mxu0 %v209
    %230 = vmatprep.subr.mxu0 0.0
    %231 = vmatpush1.msra.mxu0 %v204
    %232 = vmatprep.subr.mxu0 0.0
    %233 = vmatpush1.msra.mxu0 %v199
    %234 = vmatprep.subr.mxu0 0.0
    %235 = vmatpush1.msra.mxu0 %v194
    %236 = vmatprep.subr.mxu0 0.0
    %237 = vmatpush1.msra.mxu0 %v189
    %238 = vmatprep.subr.mxu0 0.0
    %239 = vmatpush1.msra.mxu0 %v184
    %240 = vmatprep.subr.mxu0 0.0
    %241 = vmatpush1.msra.mxu0 %v179
    %242 = vmatprep.subr.mxu0 0.0
    %243 = vmatpush1.msra.mxu0 %v174
    %244 = vmatprep.subr.mxu0 0.0
    %245 = vmatpush2.msra.mxu0 0.0
    %246 = vmatprep.subr.mxu0 0.0
    %247 = vmatpush2.msra.mxu0 0.0
    %248 = vmatprep.subr.mxu0 0.0
    %249 = vmatpush2.msra.mxu0 0.0
    %250 = vmatprep.subr.mxu0 0.0
    %251 = vmatpush2.msra.mxu0 0.0
    %252 = vmatprep.subr.mxu0 0.0
    %253 = vmatpush2.msra.mxu0 0.0
    %254 = vmatprep.subr.mxu0 0.0
    %255 = vmatpush2.msra.mxu0 0.0
    %256 = vmatprep.subr.mxu0 0.0
    %257 = vmatpush2.msra.mxu0 0.0
    %258 = vmatprep.subr.mxu0 0.0
    %259 = vmatpush2.msra.mxu0 0.0
    %260 = vmatprep.subr.mxu0 0.0
    %261 = vmatpush2.msra.mxu0 0.0
    %262 = vmatprep.subr.mxu0 0.0
    %263 = vmatpush2.msra.mxu0 0.0
    %264 = vmatprep.subr.mxu0 0.0
    %265 = vmatpush2.msra.mxu0 0.0
    %266 = vmatprep.subr.mxu0 0.0
    %267 = vmatpush2.msra.mxu0 0.0
    %268 = vmatprep.subr.mxu0 0.0
    %269 = vmatpush2.msra.mxu0 0.0
    %270 = vmatprep.subr.mxu0 0.0
    %271 = vmatpush2.msra.mxu0 0.0
    %272 = vmatprep.subr.mxu0 0.0
    %273 = vmatpush2.msra.mxu0 0.0
    %274 = vmatprep.subr.mxu0 0.0
    %275 = vmatpush2.msra.mxu0 0.0
    %276 = vmatprep.mubr.f32.mxu0 0.0
    %277 = vmatmul.mubr.f32.gmra.mxu0 %v84
    %v278 = vpop.f32.mrf.mxu0
    %v279 = vadd.f32 0.0, %v278
    %v280 = vpop.f32.mrf.mxu0
    %281 = vmatprep.mubr.f32.mxu0 0.0
    %282 = vmatmul.mubr.f32.gmra.mxu0 %v87
    %v283 = vpop.f32.mrf.mxu0
    %v284 = vadd.f32 0.0, %v283
    %v285 = vpop.f32.mrf.mxu0
    %286 = vmatprep.mubr.f32.mxu0 0.0
    %287 = vmatmul.mubr.f32.gmra.mxu0 %v90
    %v288 = vpop.f32.mrf.mxu0
    %v289 = vadd.f32 0.0, %v288
    %v290 = vpop.f32.mrf.mxu0
    %291 = vmatprep.mubr.f32.mxu0 0.0
    %292 = vmatmul.mubr.f32.gmra.mxu0 %v93
    %v293 = vpop.f32.mrf.mxu0
    %v294 = vadd.f32 0.0, %v293
    %v295 = vpop.f32.mrf.mxu0
    %296 = vmatprep.mubr.f32.mxu0 0.0
    %297 = vmatmul.mubr.f32.gmra.mxu0 %v96
    %v298 = vpop.f32.mrf.mxu0
    %v299 = vadd.f32 0.0, %v298
    %v300 = vpop.f32.mrf.mxu0
    %301 = vmatprep.mubr.f32.mxu0 0.0
    %302 = vmatmul.mubr.f32.gmra.mxu0 %v99
    %v303 = vpop.f32.mrf.mxu0
    %v304 = vadd.f32 0.0, %v303
    %v305 = vpop.f32.mrf.mxu0
    %306 = vmatprep.mubr.f32.mxu0 0.0
    %307 = vmatmul.mubr.f32.gmra.mxu0 %v102
    %v308 = vpop.f32.mrf.mxu0
    %v309 = vadd.f32 0.0, %v308
    %v310 = vpop.f32.mrf.mxu0
    %311 = vmatprep.mubr.f32.mxu0 0.0
    %312 = vmatmul.mubr.f32.gmra.mxu0 %v105
    %v313 = vpop.f32.mrf.mxu0
    %v314 = vadd.f32 0.0, %v313
    %v315 = vpop.f32.mrf.mxu0
    %316 = vdwg.mxu0
    %vm317 = vcmask 261120
    %318 = vst.msk [vmem:[%s5] sm:$0xff] %vm317, %v279
    %319 = vst.msk [vmem:[%s5 + $0x8] sm:$0xff] %vm317, %v284
    %320 = vst.msk [vmem:[%s5 + $0x10] sm:$0xff] %vm317, %v289
    %321 = vst.msk [vmem:[%s5 + $0x18] sm:$0xff] %vm317, %v294
    %322 = vst.msk [vmem:[%s5 + $0x20] sm:$0xff] %vm317, %v299
    %323 = vst.msk [vmem:[%s5 + $0x28] sm:$0xff] %vm317, %v304
    %324 = vst.msk [vmem:[%s5 + $0x30] sm:$0xff] %vm317, %v309
    %325 = vst.msk [vmem:[%s5 + $0x38] sm:$0xff] %vm317, %v314
    %v327 = vsel %vm317, %v279, 0
    %v330 = vsel %vm317, %v284, 0
    %v333 = vsel %vm317, %v289, 0
    %v336 = vsel %vm317, %v294, 0
    %v339 = vsel %vm317, %v299, 0
    %v342 = vsel %vm317, %v304, 0
    %v345 = vsel %vm317, %v309, 0
    %v348 = vsel %vm317, %v314, 0
    %350 = vmatprep.subr.mxu0 0.0
    %351 = vmatpush1.msra.mxu0 0.0
    %352 = vmatprep.subr.mxu0 0.0
    %353 = vmatpush1.msra.mxu0 0.0
    %354 = vmatprep.subr.mxu0 0.0
    %355 = vmatpush1.msra.mxu0 0.0
    %356 = vmatprep.subr.mxu0 0.0
    %357 = vmatpush1.msra.mxu0 0.0
    %358 = vmatprep.subr.mxu0 0.0
    %359 = vmatpush1.msra.mxu0 0.0
    %360 = vmatprep.subr.mxu0 0.0
    %361 = vmatpush1.msra.mxu0 0.0
    %362 = vmatprep.subr.mxu0 0.0
    %363 = vmatpush1.msra.mxu0 0.0
    %364 = vmatprep.subr.mxu0 0.0
    %365 = vmatpush1.msra.mxu0 0.0
    %366 = vmatprep.subr.mxu0 0.0
    %367 = vmatpush1.msra.mxu0 0.0
    %368 = vmatprep.subr.mxu0 0.0
    %369 = vmatpush1.msra.mxu0 0.0
    %370 = vmatprep.subr.mxu0 0.0
    %371 = vmatpush1.msra.mxu0 0.0
    %372 = vmatprep.subr.mxu0 0.0
    %373 = vmatpush1.msra.mxu0 0.0
    %374 = vmatprep.subr.mxu0 0.0
    %375 = vmatpush1.msra.mxu0 %v73
    %376 = vmatprep.subr.mxu0 0.0
    %377 = vmatpush1.msra.mxu0 %v72
    %378 = vmatprep.subr.mxu0 0.0
    %379 = vmatpush1.msra.mxu0 %v71
    %380 = vmatprep.subr.mxu0 0.0
    %381 = vmatpush1.msra.mxu0 %v70
    %382 = vmatprep.subr.mxu0 0.0
    %383 = vmatpush2.msra.mxu0 0.0
    %384 = vmatprep.subr.mxu0 0.0
    %385 = vmatpush2.msra.mxu0 0.0
    %386 = vmatprep.subr.mxu0 0.0
    %387 = vmatpush2.msra.mxu0 0.0
    %388 = vmatprep.subr.mxu0 0.0
    %389 = vmatpush2.msra.mxu0 0.0
    %390 = vmatprep.subr.mxu0 0.0
    %391 = vmatpush2.msra.mxu0 0.0
    %392 = vmatprep.subr.mxu0 0.0
    %393 = vmatpush2.msra.mxu0 0.0
    %394 = vmatprep.subr.mxu0 0.0
    %395 = vmatpush2.msra.mxu0 0.0
    %396 = vmatprep.subr.mxu0 0.0
    %397 = vmatpush2.msra.mxu0 0.0
    %398 = vmatprep.subr.mxu0 0.0
    %399 = vmatpush2.msra.mxu0 0.0
    %400 = vmatprep.subr.mxu0 0.0
    %401 = vmatpush2.msra.mxu0 0.0
    %402 = vmatprep.subr.mxu0 0.0
    %403 = vmatpush2.msra.mxu0 0.0
    %404 = vmatprep.subr.mxu0 0.0
    %405 = vmatpush2.msra.mxu0 0.0
    %406 = vmatprep.subr.mxu0 0.0
    %407 = vmatpush2.msra.mxu0 0.0
    %408 = vmatprep.subr.mxu0 0.0
    %409 = vmatpush2.msra.mxu0 0.0
    %410 = vmatprep.subr.mxu0 0.0
    %411 = vmatpush2.msra.mxu0 0.0
    %412 = vmatprep.subr.mxu0 0.0
    %413 = vmatpush2.msra.mxu0 0.0
    %414 = vmatprep.mubr.f32.mxu0 0.0
    %415 = vmatmul.mubr.f32.gmra.mxu0 %v327
    %v416 = vpop.f32.mrf.mxu0
    %v417 = vadd.f32 0.0, %v416
    %v418 = vpop.f32.mrf.mxu0
    %419 = vmatprep.mubr.f32.mxu0 0.0
    %420 = vmatmul.mubr.f32.gmra.mxu0 %v330
    %v421 = vpop.f32.mrf.mxu0
    %v422 = vadd.f32 0.0, %v421
    %v423 = vpop.f32.mrf.mxu0
    %424 = vmatprep.mubr.f32.mxu0 0.0
    %425 = vmatmul.mubr.f32.gmra.mxu0 %v333
    %v426 = vpop.f32.mrf.mxu0
    %v427 = vadd.f32 0.0, %v426
    %v428 = vpop.f32.mrf.mxu0
    %429 = vmatprep.mubr.f32.mxu0 0.0
    %430 = vmatmul.mubr.f32.gmra.mxu0 %v336
    %v431 = vpop.f32.mrf.mxu0
    %v432 = vadd.f32 0.0, %v431
    %v433 = vpop.f32.mrf.mxu0
    %434 = vmatprep.mubr.f32.mxu0 0.0
    %435 = vmatmul.mubr.f32.gmra.mxu0 %v339
    %v436 = vpop.f32.mrf.mxu0
    %v437 = vadd.f32 0.0, %v436
    %v438 = vpop.f32.mrf.mxu0
    %439 = vmatprep.mubr.f32.mxu0 0.0
    %440 = vmatmul.mubr.f32.gmra.mxu0 %v342
    %v441 = vpop.f32.mrf.mxu0
    %v442 = vadd.f32 0.0, %v441
    %v443 = vpop.f32.mrf.mxu0
    %444 = vmatprep.mubr.f32.mxu0 0.0
    %445 = vmatmul.mubr.f32.gmra.mxu0 %v345
    %v446 = vpop.f32.mrf.mxu0
    %v447 = vadd.f32 0.0, %v446
    %v448 = vpop.f32.mrf.mxu0
    %449 = vmatprep.mubr.f32.mxu0 0.0
    %450 = vmatmul.mubr.f32.gmra.mxu0 %v348
    %v451 = vpop.f32.mrf.mxu0
    %v452 = vadd.f32 0.0, %v451
    %v453 = vpop.f32.mrf.mxu0
    %454 = vdwg.mxu0
    %s455 = scalar_lea.vmem [#allocation9], 64
    %v456 = vld [vmem:[%s455] sm:$0xff]
    %v457 = vld [vmem:[%s455 + $0x8] sm:$0xff]
    %v458 = vld [vmem:[%s455 + $0x10] sm:$0xff]
    %v459 = vld [vmem:[%s455 + $0x18] sm:$0xff]
    %v460 = vld [vmem:[%s455 + $0x20] sm:$0xff]
    %v461 = vld [vmem:[%s455 + $0x28] sm:$0xff]
    %v462 = vld [vmem:[%s455 + $0x30] sm:$0xff]
    %v463 = vld [vmem:[%s455 + $0x38] sm:$0xff]
    %v465 = vsel %vm82, %v456, 0
    %v468 = vsel %vm82, %v457, 0
    %v471 = vsel %vm82, %v458, 0
    %v474 = vsel %vm82, %v459, 0
    %v477 = vsel %vm82, %v460, 0
    %v480 = vsel %vm82, %v461, 0
    %v483 = vsel %vm82, %v462, 0
    %v486 = vsel %vm82, %v463, 0
    %488 = vmatprep.subr.mxu0 0.0
    %489 = vmatpush1.msra.mxu0 0.0
    %490 = vmatprep.subr.mxu0 0.0
    %491 = vmatpush1.msra.mxu0 0.0
    %492 = vmatprep.subr.mxu0 0.0
    %493 = vmatpush1.msra.mxu0 0.0
    %494 = vmatprep.subr.mxu0 0.0
    %495 = vmatpush1.msra.mxu0 0.0
    %496 = vmatprep.subr.mxu0 0.0
    %497 = vmatpush1.msra.mxu0 0.0
    %498 = vmatprep.subr.mxu0 0.0
    %499 = vmatpush1.msra.mxu0 0.0
    %500 = vmatprep.subr.mxu0 0.0
    %501 = vmatpush1.msra.mxu0 0.0
    %502 = vmatprep.subr.mxu0 0.0
    %503 = vmatpush1.msra.mxu0 0.0
    %504 = vmatprep.subr.mxu0 0.0
    %505 = vmatpush1.msra.mxu0 %v69
    %506 = vmatprep.subr.mxu0 0.0
    %507 = vmatpush1.msra.mxu0 %v68
    %508 = vmatprep.subr.mxu0 0.0
    %509 = vmatpush1.msra.mxu0 %v67
    %510 = vmatprep.subr.mxu0 0.0
    %511 = vmatpush1.msra.mxu0 %v66
    %512 = vmatprep.subr.mxu0 0.0
    %513 = vmatpush1.msra.mxu0 %v65
    %514 = vmatprep.subr.mxu0 0.0
    %515 = vmatpush1.msra.mxu0 %v64
    %516 = vmatprep.subr.mxu0 0.0
    %517 = vmatpush1.msra.mxu0 %v63
    %518 = vmatprep.subr.mxu0 0.0
    %519 = vmatpush1.msra.mxu0 %v62
    %520 = vmatprep.subr.mxu0 0.0
    %521 = vmatpush2.msra.mxu0 0.0
    %522 = vmatprep.subr.mxu0 0.0
    %523 = vmatpush2.msra.mxu0 0.0
    %524 = vmatprep.subr.mxu0 0.0
    %525 = vmatpush2.msra.mxu0 0.0
    %526 = vmatprep.subr.mxu0 0.0
    %527 = vmatpush2.msra.mxu0 0.0
    %528 = vmatprep.subr.mxu0 0.0
    %529 = vmatpush2.msra.mxu0 0.0
    %530 = vmatprep.subr.mxu0 0.0
    %531 = vmatpush2.msra.mxu0 0.0
    %532 = vmatprep.subr.mxu0 0.0
    %533 = vmatpush2.msra.mxu0 0.0
    %534 = vmatprep.subr.mxu0 0.0
    %535 = vmatpush2.msra.mxu0 0.0
    %536 = vmatprep.subr.mxu0 0.0
    %537 = vmatpush2.msra.mxu0 0.0
    %538 = vmatprep.subr.mxu0 0.0
    %539 = vmatpush2.msra.mxu0 0.0
    %540 = vmatprep.subr.mxu0 0.0
    %541 = vmatpush2.msra.mxu0 0.0
    %542 = vmatprep.subr.mxu0 0.0
    %543 = vmatpush2.msra.mxu0 0.0
    %544 = vmatprep.subr.mxu0 0.0
    %545 = vmatpush2.msra.mxu0 0.0
    %546 = vmatprep.subr.mxu0 0.0
    %547 = vmatpush2.msra.mxu0 0.0
    %548 = vmatprep.subr.mxu0 0.0
    %549 = vmatpush2.msra.mxu0 0.0
    %550 = vmatprep.subr.mxu0 0.0
    %551 = vmatpush2.msra.mxu0 0.0
    %552 = vmatprep.mubr.f32.mxu0 0.0
    %553 = vmatmul.mubr.f32.gmra.mxu0 %v465
    %v554 = vpop.f32.mrf.mxu0
    %v555 = vadd.f32 0.0, %v554
    %v556 = vpop.f32.mrf.mxu0
    %557 = vmatprep.mubr.f32.mxu0 0.0
    %558 = vmatmul.mubr.f32.gmra.mxu0 %v468
    %v559 = vpop.f32.mrf.mxu0
    %v560 = vadd.f32 0.0, %v559
    %v561 = vpop.f32.mrf.mxu0
    %562 = vmatprep.mubr.f32.mxu0 0.0
    %563 = vmatmul.mubr.f32.gmra.mxu0 %v471
    %v564 = vpop.f32.mrf.mxu0
    %v565 = vadd.f32 0.0, %v564
    %v566 = vpop.f32.mrf.mxu0
    %567 = vmatprep.mubr.f32.mxu0 0.0
    %568 = vmatmul.mubr.f32.gmra.mxu0 %v474
    %v569 = vpop.f32.mrf.mxu0
    %v570 = vadd.f32 0.0, %v569
    %v571 = vpop.f32.mrf.mxu0
    %572 = vmatprep.mubr.f32.mxu0 0.0
    %573 = vmatmul.mubr.f32.gmra.mxu0 %v477
    %v574 = vpop.f32.mrf.mxu0
    %v575 = vadd.f32 0.0, %v574
    %v576 = vpop.f32.mrf.mxu0
    %577 = vmatprep.mubr.f32.mxu0 0.0
    %578 = vmatmul.mubr.f32.gmra.mxu0 %v480
    %v579 = vpop.f32.mrf.mxu0
    %v580 = vadd.f32 0.0, %v579
    %v581 = vpop.f32.mrf.mxu0
    %582 = vmatprep.mubr.f32.mxu0 0.0
    %583 = vmatmul.mubr.f32.gmra.mxu0 %v483
    %v584 = vpop.f32.mrf.mxu0
    %v585 = vadd.f32 0.0, %v584
    %v586 = vpop.f32.mrf.mxu0
    %587 = vmatprep.mubr.f32.mxu0 0.0
    %588 = vmatmul.mubr.f32.gmra.mxu0 %v486
    %v589 = vpop.f32.mrf.mxu0
    %v590 = vadd.f32 0.0, %v589
    %v591 = vpop.f32.mrf.mxu0
    %592 = vdwg.mxu0
    %593 = vmatprep.subr.mxu0 0.0
    %594 = vmatpush1.msra.mxu0 0.0
    %595 = vmatprep.subr.mxu0 0.0
    %596 = vmatpush1.msra.mxu0 0.0
    %597 = vmatprep.subr.mxu0 0.0
    %598 = vmatpush1.msra.mxu0 0.0
    %599 = vmatprep.subr.mxu0 0.0
    %600 = vmatpush1.msra.mxu0 0.0
    %601 = vmatprep.subr.mxu0 0.0
    %602 = vmatpush1.msra.mxu0 0.0
    %603 = vmatprep.subr.mxu0 0.0
    %604 = vmatpush1.msra.mxu0 0.0
    %605 = vmatprep.subr.mxu0 0.0
    %606 = vmatpush1.msra.mxu0 0.0
    %607 = vmatprep.subr.mxu0 0.0
    %608 = vmatpush1.msra.mxu0 0.0
    %609 = vmatprep.subr.mxu0 0.0
    %610 = vmatpush1.msra.mxu0 %v590
    %611 = vmatprep.subr.mxu0 0.0
    %612 = vmatpush1.msra.mxu0 %v585
    %613 = vmatprep.subr.mxu0 0.0
    %614 = vmatpush1.msra.mxu0 %v580
    %615 = vmatprep.subr.mxu0 0.0
    %616 = vmatpush1.msra.mxu0 %v575
    %617 = vmatprep.subr.mxu0 0.0
    %618 = vmatpush1.msra.mxu0 %v570
    %619 = vmatprep.subr.mxu0 0.0
    %620 = vmatpush1.msra.mxu0 %v565
    %621 = vmatprep.subr.mxu0 0.0
    %622 = vmatpush1.msra.mxu0 %v560
    %623 = vmatprep.subr.mxu0 0.0
    %624 = vmatpush1.msra.mxu0 %v555
    %625 = vmatprep.subr.mxu0 0.0
    %626 = vmatpush2.msra.mxu0 0.0
    %627 = vmatprep.subr.mxu0 0.0
    %628 = vmatpush2.msra.mxu0 0.0
    %629 = vmatprep.subr.mxu0 0.0
    %630 = vmatpush2.msra.mxu0 0.0
    %631 = vmatprep.subr.mxu0 0.0
    %632 = vmatpush2.msra.mxu0 0.0
    %633 = vmatprep.subr.mxu0 0.0
    %634 = vmatpush2.msra.mxu0 0.0
    %635 = vmatprep.subr.mxu0 0.0
    %636 = vmatpush2.msra.mxu0 0.0
    %637 = vmatprep.subr.mxu0 0.0
    %638 = vmatpush2.msra.mxu0 0.0
    %639 = vmatprep.subr.mxu0 0.0
    %640 = vmatpush2.msra.mxu0 0.0
    %641 = vmatprep.subr.mxu0 0.0
    %642 = vmatpush2.msra.mxu0 0.0
    %643 = vmatprep.subr.mxu0 0.0
    %644 = vmatpush2.msra.mxu0 0.0
    %645 = vmatprep.subr.mxu0 0.0
    %646 = vmatpush2.msra.mxu0 0.0
    %647 = vmatprep.subr.mxu0 0.0
    %648 = vmatpush2.msra.mxu0 0.0
    %649 = vmatprep.subr.mxu0 0.0
    %650 = vmatpush2.msra.mxu0 0.0
    %651 = vmatprep.subr.mxu0 0.0
    %652 = vmatpush2.msra.mxu0 0.0
    %653 = vmatprep.subr.mxu0 0.0
    %654 = vmatpush2.msra.mxu0 0.0
    %655 = vmatprep.subr.mxu0 0.0
    %656 = vmatpush2.msra.mxu0 0.0
    %657 = vmatprep.mubr.f32.mxu0 0.0
    %658 = vmatmul.mubr.f32.gmra.mxu0 %v465
    %v659 = vpop.f32.mrf.mxu0
    %v660 = vadd.f32 0.0, %v659
    %v661 = vpop.f32.mrf.mxu0
    %662 = vmatprep.mubr.f32.mxu0 0.0
    %663 = vmatmul.mubr.f32.gmra.mxu0 %v468
    %v664 = vpop.f32.mrf.mxu0
    %v665 = vadd.f32 0.0, %v664
    %v666 = vpop.f32.mrf.mxu0
    %667 = vmatprep.mubr.f32.mxu0 0.0
    %668 = vmatmul.mubr.f32.gmra.mxu0 %v471
    %v669 = vpop.f32.mrf.mxu0
    %v670 = vadd.f32 0.0, %v669
    %v671 = vpop.f32.mrf.mxu0
    %672 = vmatprep.mubr.f32.mxu0 0.0
    %673 = vmatmul.mubr.f32.gmra.mxu0 %v474
    %v674 = vpop.f32.mrf.mxu0
    %v675 = vadd.f32 0.0, %v674
    %v676 = vpop.f32.mrf.mxu0
    %677 = vmatprep.mubr.f32.mxu0 0.0
    %678 = vmatmul.mubr.f32.gmra.mxu0 %v477
    %v679 = vpop.f32.mrf.mxu0
    %v680 = vadd.f32 0.0, %v679
    %v681 = vpop.f32.mrf.mxu0
    %682 = vmatprep.mubr.f32.mxu0 0.0
    %683 = vmatmul.mubr.f32.gmra.mxu0 %v480
    %v684 = vpop.f32.mrf.mxu0
    %v685 = vadd.f32 0.0, %v684
    %v686 = vpop.f32.mrf.mxu0
    %687 = vmatprep.mubr.f32.mxu0 0.0
    %688 = vmatmul.mubr.f32.gmra.mxu0 %v483
    %v689 = vpop.f32.mrf.mxu0
    %v690 = vadd.f32 0.0, %v689
    %v691 = vpop.f32.mrf.mxu0
    %692 = vmatprep.mubr.f32.mxu0 0.0
    %693 = vmatmul.mubr.f32.gmra.mxu0 %v486
    %v694 = vpop.f32.mrf.mxu0
    %v695 = vadd.f32 0.0, %v694
    %v696 = vpop.f32.mrf.mxu0
    %697 = vdwg.mxu0
    %s698 = scalar_lea.vmem %s5, 64
    %699 = vst.msk [vmem:[%s698] sm:$0xff] %vm317, %v660
    %700 = vst.msk [vmem:[%s698 + $0x8] sm:$0xff] %vm317, %v665
    %701 = vst.msk [vmem:[%s698 + $0x10] sm:$0xff] %vm317, %v670
    %702 = vst.msk [vmem:[%s698 + $0x18] sm:$0xff] %vm317, %v675
    %703 = vst.msk [vmem:[%s698 + $0x20] sm:$0xff] %vm317, %v680
    %704 = vst.msk [vmem:[%s698 + $0x28] sm:$0xff] %vm317, %v685
    %705 = vst.msk [vmem:[%s698 + $0x30] sm:$0xff] %vm317, %v690
    %706 = vst.msk [vmem:[%s698 + $0x38] sm:$0xff] %vm317, %v695
    %v708 = vsel %vm317, %v660, 0
    %v711 = vsel %vm317, %v665, 0
    %v714 = vsel %vm317, %v670, 0
    %v717 = vsel %vm317, %v675, 0
    %v720 = vsel %vm317, %v680, 0
    %v723 = vsel %vm317, %v685, 0
    %v726 = vsel %vm317, %v690, 0
    %v729 = vsel %vm317, %v695, 0
    %731 = vmatprep.subr.mxu0 0.0
    %732 = vmatpush1.msra.mxu0 0.0
    %733 = vmatprep.subr.mxu0 0.0
    %734 = vmatpush1.msra.mxu0 0.0
    %735 = vmatprep.subr.mxu0 0.0
    %736 = vmatpush1.msra.mxu0 0.0
    %737 = vmatprep.subr.mxu0 0.0
    %738 = vmatpush1.msra.mxu0 0.0
    %739 = vmatprep.subr.mxu0 0.0
    %740 = vmatpush1.msra.mxu0 0.0
    %741 = vmatprep.subr.mxu0 0.0
    %742 = vmatpush1.msra.mxu0 0.0
    %743 = vmatprep.subr.mxu0 0.0
    %744 = vmatpush1.msra.mxu0 0.0
    %745 = vmatprep.subr.mxu0 0.0
    %746 = vmatpush1.msra.mxu0 0.0
    %747 = vmatprep.subr.mxu0 0.0
    %748 = vmatpush1.msra.mxu0 0.0
    %749 = vmatprep.subr.mxu0 0.0
    %750 = vmatpush1.msra.mxu0 0.0
    %751 = vmatprep.subr.mxu0 0.0
    %752 = vmatpush1.msra.mxu0 0.0
    %753 = vmatprep.subr.mxu0 0.0
    %754 = vmatpush1.msra.mxu0 0.0
    %755 = vmatprep.subr.mxu0 0.0
    %756 = vmatpush1.msra.mxu0 %v73
    %757 = vmatprep.subr.mxu0 0.0
    %758 = vmatpush1.msra.mxu0 %v72
    %759 = vmatprep.subr.mxu0 0.0
    %760 = vmatpush1.msra.mxu0 %v71
    %761 = vmatprep.subr.mxu0 0.0
    %762 = vmatpush1.msra.mxu0 %v70
    %763 = vmatprep.subr.mxu0 0.0
    %764 = vmatpush2.msra.mxu0 0.0
    %765 = vmatprep.subr.mxu0 0.0
    %766 = vmatpush2.msra.mxu0 0.0
    %767 = vmatprep.subr.mxu0 0.0
    %768 = vmatpush2.msra.mxu0 0.0
    %769 = vmatprep.subr.mxu0 0.0
    %770 = vmatpush2.msra.mxu0 0.0
    %771 = vmatprep.subr.mxu0 0.0
    %772 = vmatpush2.msra.mxu0 0.0
    %773 = vmatprep.subr.mxu0 0.0
    %774 = vmatpush2.msra.mxu0 0.0
    %775 = vmatprep.subr.mxu0 0.0
    %776 = vmatpush2.msra.mxu0 0.0
    %777 = vmatprep.subr.mxu0 0.0
    %778 = vmatpush2.msra.mxu0 0.0
    %779 = vmatprep.subr.mxu0 0.0
    %780 = vmatpush2.msra.mxu0 0.0
    %781 = vmatprep.subr.mxu0 0.0
    %782 = vmatpush2.msra.mxu0 0.0
    %783 = vmatprep.subr.mxu0 0.0
    %784 = vmatpush2.msra.mxu0 0.0
    %785 = vmatprep.subr.mxu0 0.0
    %786 = vmatpush2.msra.mxu0 0.0
    %787 = vmatprep.subr.mxu0 0.0
    %788 = vmatpush2.msra.mxu0 0.0
    %789 = vmatprep.subr.mxu0 0.0
    %790 = vmatpush2.msra.mxu0 0.0
    %791 = vmatprep.subr.mxu0 0.0
    %792 = vmatpush2.msra.mxu0 0.0
    %793 = vmatprep.subr.mxu0 0.0
    %794 = vmatpush2.msra.mxu0 0.0
    %795 = vmatprep.mubr.f32.mxu0 0.0
    %796 = vmatmul.mubr.f32.gmra.mxu0 %v708
    %v797 = vpop.f32.mrf.mxu0
    %v798 = vadd.f32 0.0, %v797
    %v799 = vpop.f32.mrf.mxu0
    %800 = vmatprep.mubr.f32.mxu0 0.0
    %801 = vmatmul.mubr.f32.gmra.mxu0 %v711
    %v802 = vpop.f32.mrf.mxu0
    %v803 = vadd.f32 0.0, %v802
    %v804 = vpop.f32.mrf.mxu0
    %805 = vmatprep.mubr.f32.mxu0 0.0
    %806 = vmatmul.mubr.f32.gmra.mxu0 %v714
    %v807 = vpop.f32.mrf.mxu0
    %v808 = vadd.f32 0.0, %v807
    %v809 = vpop.f32.mrf.mxu0
    %810 = vmatprep.mubr.f32.mxu0 0.0
    %811 = vmatmul.mubr.f32.gmra.mxu0 %v717
    %v812 = vpop.f32.mrf.mxu0
    %v813 = vadd.f32 0.0, %v812
    %v814 = vpop.f32.mrf.mxu0
    %815 = vmatprep.mubr.f32.mxu0 0.0
    %816 = vmatmul.mubr.f32.gmra.mxu0 %v720
    %v817 = vpop.f32.mrf.mxu0
    %v818 = vadd.f32 0.0, %v817
    %v819 = vpop.f32.mrf.mxu0
    %820 = vmatprep.mubr.f32.mxu0 0.0
    %821 = vmatmul.mubr.f32.gmra.mxu0 %v723
    %v822 = vpop.f32.mrf.mxu0
    %v823 = vadd.f32 0.0, %v822
    %v824 = vpop.f32.mrf.mxu0
    %825 = vmatprep.mubr.f32.mxu0 0.0
    %826 = vmatmul.mubr.f32.gmra.mxu0 %v726
    %v827 = vpop.f32.mrf.mxu0
    %v828 = vadd.f32 0.0, %v827
    %v829 = vpop.f32.mrf.mxu0
    %830 = vmatprep.mubr.f32.mxu0 0.0
    %831 = vmatmul.mubr.f32.gmra.mxu0 %v729
    %v832 = vpop.f32.mrf.mxu0
    %v833 = vadd.f32 0.0, %v832
    %v834 = vpop.f32.mrf.mxu0
    %835 = vdwg.mxu0
    %s836 = scalar_lea.vmem [#allocation9], 128
    %v837 = vld [vmem:[%s836] sm:$0xff]
    %v838 = vld [vmem:[%s836 + $0x8] sm:$0xff]
    %v839 = vld [vmem:[%s836 + $0x10] sm:$0xff]
    %v840 = vld [vmem:[%s836 + $0x18] sm:$0xff]
    %v841 = vld [vmem:[%s836 + $0x20] sm:$0xff]
    %v842 = vld [vmem:[%s836 + $0x28] sm:$0xff]
    %v843 = vld [vmem:[%s836 + $0x30] sm:$0xff]
    %v844 = vld [vmem:[%s836 + $0x38] sm:$0xff]
    %v846 = vsel %vm82, %v837, 0
    %v849 = vsel %vm82, %v838, 0
    %v852 = vsel %vm82, %v839, 0
    %v855 = vsel %vm82, %v840, 0
    %v858 = vsel %vm82, %v841, 0
    %v861 = vsel %vm82, %v842, 0
    %v864 = vsel %vm82, %v843, 0
    %v867 = vsel %vm82, %v844, 0
    %869 = vmatprep.subr.mxu0 0.0
    %870 = vmatpush1.msra.mxu0 0.0
    %871 = vmatprep.subr.mxu0 0.0
    %872 = vmatpush1.msra.mxu0 0.0
    %873 = vmatprep.subr.mxu0 0.0
    %874 = vmatpush1.msra.mxu0 0.0
    %875 = vmatprep.subr.mxu0 0.0
    %876 = vmatpush1.msra.mxu0 0.0
    %877 = vmatprep.subr.mxu0 0.0
    %878 = vmatpush1.msra.mxu0 0.0
    %879 = vmatprep.subr.mxu0 0.0
    %880 = vmatpush1.msra.mxu0 0.0
    %881 = vmatprep.subr.mxu0 0.0
    %882 = vmatpush1.msra.mxu0 0.0
    %883 = vmatprep.subr.mxu0 0.0
    %884 = vmatpush1.msra.mxu0 0.0
    %885 = vmatprep.subr.mxu0 0.0
    %886 = vmatpush1.msra.mxu0 %v69
    %887 = vmatprep.subr.mxu0 0.0
    %888 = vmatpush1.msra.mxu0 %v68
    %889 = vmatprep.subr.mxu0 0.0
    %890 = vmatpush1.msra.mxu0 %v67
    %891 = vmatprep.subr.mxu0 0.0
    %892 = vmatpush1.msra.mxu0 %v66
    %893 = vmatprep.subr.mxu0 0.0
    %894 = vmatpush1.msra.mxu0 %v65
    %895 = vmatprep.subr.mxu0 0.0
    %896 = vmatpush1.msra.mxu0 %v64
    %897 = vmatprep.subr.mxu0 0.0
    %898 = vmatpush1.msra.mxu0 %v63
    %899 = vmatprep.subr.mxu0 0.0
    %900 = vmatpush1.msra.mxu0 %v62
    %901 = vmatprep.subr.mxu0 0.0
    %902 = vmatpush2.msra.mxu0 0.0
    %903 = vmatprep.subr.mxu0 0.0
    %904 = vmatpush2.msra.mxu0 0.0
    %905 = vmatprep.subr.mxu0 0.0
    %906 = vmatpush2.msra.mxu0 0.0
    %907 = vmatprep.subr.mxu0 0.0
    %908 = vmatpush2.msra.mxu0 0.0
    %909 = vmatprep.subr.mxu0 0.0
    %910 = vmatpush2.msra.mxu0 0.0
    %911 = vmatprep.subr.mxu0 0.0
    %912 = vmatpush2.msra.mxu0 0.0
    %913 = vmatprep.subr.mxu0 0.0
    %914 = vmatpush2.msra.mxu0 0.0
    %915 = vmatprep.subr.mxu0 0.0
    %916 = vmatpush2.msra.mxu0 0.0
    %917 = vmatprep.subr.mxu0 0.0
    %918 = vmatpush2.msra.mxu0 0.0
    %919 = vmatprep.subr.mxu0 0.0
    %920 = vmatpush2.msra.mxu0 0.0
    %921 = vmatprep.subr.mxu0 0.0
    %922 = vmatpush2.msra.mxu0 0.0
    %923 = vmatprep.subr.mxu0 0.0
    %924 = vmatpush2.msra.mxu0 0.0
    %925 = vmatprep.subr.mxu0 0.0
    %926 = vmatpush2.msra.mxu0 0.0
    %927 = vmatprep.subr.mxu0 0.0
    %928 = vmatpush2.msra.mxu0 0.0
    %929 = vmatprep.subr.mxu0 0.0
    %930 = vmatpush2.msra.mxu0 0.0
    %931 = vmatprep.subr.mxu0 0.0
    %932 = vmatpush2.msra.mxu0 0.0
    %933 = vmatprep.mubr.f32.mxu0 0.0
    %934 = vmatmul.mubr.f32.gmra.mxu0 %v846
    %v935 = vpop.f32.mrf.mxu0
    %v936 = vadd.f32 0.0, %v935
    %v937 = vpop.f32.mrf.mxu0
    %938 = vmatprep.mubr.f32.mxu0 0.0
    %939 = vmatmul.mubr.f32.gmra.mxu0 %v849
    %v940 = vpop.f32.mrf.mxu0
    %v941 = vadd.f32 0.0, %v940
    %v942 = vpop.f32.mrf.mxu0
    %943 = vmatprep.mubr.f32.mxu0 0.0
    %944 = vmatmul.mubr.f32.gmra.mxu0 %v852
    %v945 = vpop.f32.mrf.mxu0
    %v946 = vadd.f32 0.0, %v945
    %v947 = vpop.f32.mrf.mxu0
    %948 = vmatprep.mubr.f32.mxu0 0.0
    %949 = vmatmul.mubr.f32.gmra.mxu0 %v855
    %v950 = vpop.f32.mrf.mxu0
    %v951 = vadd.f32 0.0, %v950
    %v952 = vpop.f32.mrf.mxu0
    %953 = vmatprep.mubr.f32.mxu0 0.0
    %954 = vmatmul.mubr.f32.gmra.mxu0 %v858
    %v955 = vpop.f32.mrf.mxu0
    %v956 = vadd.f32 0.0, %v955
    %v957 = vpop.f32.mrf.mxu0
    %958 = vmatprep.mubr.f32.mxu0 0.0
    %959 = vmatmul.mubr.f32.gmra.mxu0 %v861
    %v960 = vpop.f32.mrf.mxu0
    %v961 = vadd.f32 0.0, %v960
    %v962 = vpop.f32.mrf.mxu0
    %963 = vmatprep.mubr.f32.mxu0 0.0
    %964 = vmatmul.mubr.f32.gmra.mxu0 %v864
    %v965 = vpop.f32.mrf.mxu0
    %v966 = vadd.f32 0.0, %v965
    %v967 = vpop.f32.mrf.mxu0
    %968 = vmatprep.mubr.f32.mxu0 0.0
    %969 = vmatmul.mubr.f32.gmra.mxu0 %v867
    %v970 = vpop.f32.mrf.mxu0
    %v971 = vadd.f32 0.0, %v970
    %v972 = vpop.f32.mrf.mxu0
    %973 = vdwg.mxu0
    %974 = vmatprep.subr.mxu0 0.0
    %975 = vmatpush1.msra.mxu0 0.0
    %976 = vmatprep.subr.mxu0 0.0
    %977 = vmatpush1.msra.mxu0 0.0
    %978 = vmatprep.subr.mxu0 0.0
    %979 = vmatpush1.msra.mxu0 0.0
    %980 = vmatprep.subr.mxu0 0.0
    %981 = vmatpush1.msra.mxu0 0.0
    %982 = vmatprep.subr.mxu0 0.0
    %983 = vmatpush1.msra.mxu0 0.0
    %984 = vmatprep.subr.mxu0 0.0
    %985 = vmatpush1.msra.mxu0 0.0
    %986 = vmatprep.subr.mxu0 0.0
    %987 = vmatpush1.msra.mxu0 0.0
    %988 = vmatprep.subr.mxu0 0.0
    %989 = vmatpush1.msra.mxu0 0.0
    %990 = vmatprep.subr.mxu0 0.0
    %991 = vmatpush1.msra.mxu0 %v971
    %992 = vmatprep.subr.mxu0 0.0
    %993 = vmatpush1.msra.mxu0 %v966
    %994 = vmatprep.subr.mxu0 0.0
    %995 = vmatpush1.msra.mxu0 %v961
    %996 = vmatprep.subr.mxu0 0.0
    %997 = vmatpush1.msra.mxu0 %v956
    %998 = vmatprep.subr.mxu0 0.0
    %999 = vmatpush1.msra.mxu0 %v951
    %1000 = vmatprep.subr.mxu0 0.0
    %1001 = vmatpush1.msra.mxu0 %v946
    %1002 = vmatprep.subr.mxu0 0.0
    %1003 = vmatpush1.msra.mxu0 %v941
    %1004 = vmatprep.subr.mxu0 0.0
    %1005 = vmatpush1.msra.mxu0 %v936
    %1006 = vmatprep.subr.mxu0 0.0
    %1007 = vmatpush2.msra.mxu0 0.0
    %1008 = vmatprep.subr.mxu0 0.0
    %1009 = vmatpush2.msra.mxu0 0.0
    %1010 = vmatprep.subr.mxu0 0.0
    %1011 = vmatpush2.msra.mxu0 0.0
    %1012 = vmatprep.subr.mxu0 0.0
    %1013 = vmatpush2.msra.mxu0 0.0
    %1014 = vmatprep.subr.mxu0 0.0
    %1015 = vmatpush2.msra.mxu0 0.0
    %1016 = vmatprep.subr.mxu0 0.0
    %1017 = vmatpush2.msra.mxu0 0.0
    %1018 = vmatprep.subr.mxu0 0.0
    %1019 = vmatpush2.msra.mxu0 0.0
    %1020 = vmatprep.subr.mxu0 0.0
    %1021 = vmatpush2.msra.mxu0 0.0
    %1022 = vmatprep.subr.mxu0 0.0
    %1023 = vmatpush2.msra.mxu0 0.0
    %1024 = vmatprep.subr.mxu0 0.0
    %1025 = vmatpush2.msra.mxu0 0.0
    %1026 = vmatprep.subr.mxu0 0.0
    %1027 = vmatpush2.msra.mxu0 0.0
    %1028 = vmatprep.subr.mxu0 0.0
    %1029 = vmatpush2.msra.mxu0 0.0
    %1030 = vmatprep.subr.mxu0 0.0
    %1031 = vmatpush2.msra.mxu0 0.0
    %1032 = vmatprep.subr.mxu0 0.0
    %1033 = vmatpush2.msra.mxu0 0.0
    %1034 = vmatprep.subr.mxu0 0.0
    %1035 = vmatpush2.msra.mxu0 0.0
    %1036 = vmatprep.subr.mxu0 0.0
    %1037 = vmatpush2.msra.mxu0 0.0
    %1038 = vmatprep.mubr.f32.mxu0 0.0
    %1039 = vmatmul.mubr.f32.gmra.mxu0 %v846
    %v1040 = vpop.f32.mrf.mxu0
    %v1041 = vadd.f32 0.0, %v1040
    %v1042 = vpop.f32.mrf.mxu0
    %1043 = vmatprep.mubr.f32.mxu0 0.0
    %1044 = vmatmul.mubr.f32.gmra.mxu0 %v849
    %v1045 = vpop.f32.mrf.mxu0
    %v1046 = vadd.f32 0.0, %v1045
    %v1047 = vpop.f32.mrf.mxu0
    %1048 = vmatprep.mubr.f32.mxu0 0.0
    %1049 = vmatmul.mubr.f32.gmra.mxu0 %v852
    %v1050 = vpop.f32.mrf.mxu0
    %v1051 = vadd.f32 0.0, %v1050
    %v1052 = vpop.f32.mrf.mxu0
    %1053 = vmatprep.mubr.f32.mxu0 0.0
    %1054 = vmatmul.mubr.f32.gmra.mxu0 %v855
    %v1055 = vpop.f32.mrf.mxu0
    %v1056 = vadd.f32 0.0, %v1055
    %v1057 = vpop.f32.mrf.mxu0
    %1058 = vmatprep.mubr.f32.mxu0 0.0
    %1059 = vmatmul.mubr.f32.gmra.mxu0 %v858
    %v1060 = vpop.f32.mrf.mxu0
    %v1061 = vadd.f32 0.0, %v1060
    %v1062 = vpop.f32.mrf.mxu0
    %1063 = vmatprep.mubr.f32.mxu0 0.0
    %1064 = vmatmul.mubr.f32.gmra.mxu0 %v861
    %v1065 = vpop.f32.mrf.mxu0
    %v1066 = vadd.f32 0.0, %v1065
    %v1067 = vpop.f32.mrf.mxu0
    %1068 = vmatprep.mubr.f32.mxu0 0.0
    %1069 = vmatmul.mubr.f32.gmra.mxu0 %v864
    %v1070 = vpop.f32.mrf.mxu0
    %v1071 = vadd.f32 0.0, %v1070
    %v1072 = vpop.f32.mrf.mxu0
    %1073 = vmatprep.mubr.f32.mxu0 0.0
    %1074 = vmatmul.mubr.f32.gmra.mxu0 %v867
    %v1075 = vpop.f32.mrf.mxu0
    %v1076 = vadd.f32 0.0, %v1075
    %v1077 = vpop.f32.mrf.mxu0
    %1078 = vdwg.mxu0
    %s1079 = scalar_lea.vmem %s5, 128
    %1080 = vst.msk [vmem:[%s1079] sm:$0xff] %vm317, %v1041
    %1081 = vst.msk [vmem:[%s1079 + $0x8] sm:$0xff] %vm317, %v1046
    %1082 = vst.msk [vmem:[%s1079 + $0x10] sm:$0xff] %vm317, %v1051
    %1083 = vst.msk [vmem:[%s1079 + $0x18] sm:$0xff] %vm317, %v1056
    %1084 = vst.msk [vmem:[%s1079 + $0x20] sm:$0xff] %vm317, %v1061
    %1085 = vst.msk [vmem:[%s1079 + $0x28] sm:$0xff] %vm317, %v1066
    %1086 = vst.msk [vmem:[%s1079 + $0x30] sm:$0xff] %vm317, %v1071
    %1087 = vst.msk [vmem:[%s1079 + $0x38] sm:$0xff] %vm317, %v1076
    %v1089 = vsel %vm317, %v1041, 0
    %v1092 = vsel %vm317, %v1046, 0
    %v1095 = vsel %vm317, %v1051, 0
    %v1098 = vsel %vm317, %v1056, 0
    %v1101 = vsel %vm317, %v1061, 0
    %v1104 = vsel %vm317, %v1066, 0
    %v1107 = vsel %vm317, %v1071, 0
    %v1110 = vsel %vm317, %v1076, 0
    %1112 = vmatprep.subr.mxu0 0.0
    %1113 = vmatpush1.msra.mxu0 0.0
    %1114 = vmatprep.subr.mxu0 0.0
    %1115 = vmatpush1.msra.mxu0 0.0
    %1116 = vmatprep.subr.mxu0 0.0
    %1117 = vmatpush1.msra.mxu0 0.0
    %1118 = vmatprep.subr.mxu0 0.0
    %1119 = vmatpush1.msra.mxu0 0.0
    %1120 = vmatprep.subr.mxu0 0.0
    %1121 = vmatpush1.msra.mxu0 0.0
    %1122 = vmatprep.subr.mxu0 0.0
    %1123 = vmatpush1.msra.mxu0 0.0
    %1124 = vmatprep.subr.mxu0 0.0
    %1125 = vmatpush1.msra.mxu0 0.0
    %1126 = vmatprep.subr.mxu0 0.0
    %1127 = vmatpush1.msra.mxu0 0.0
    %1128 = vmatprep.subr.mxu0 0.0
    %1129 = vmatpush1.msra.mxu0 0.0
    %1130 = vmatprep.subr.mxu0 0.0
    %1131 = vmatpush1.msra.mxu0 0.0
    %1132 = vmatprep.subr.mxu0 0.0
    %1133 = vmatpush1.msra.mxu0 0.0
    %1134 = vmatprep.subr.mxu0 0.0
    %1135 = vmatpush1.msra.mxu0 0.0
    %1136 = vmatprep.subr.mxu0 0.0
    %1137 = vmatpush1.msra.mxu0 %v73
    %1138 = vmatprep.subr.mxu0 0.0
    %1139 = vmatpush1.msra.mxu0 %v72
    %1140 = vmatprep.subr.mxu0 0.0
    %1141 = vmatpush1.msra.mxu0 %v71
    %1142 = vmatprep.subr.mxu0 0.0
    %1143 = vmatpush1.msra.mxu0 %v70
    %1144 = vmatprep.subr.mxu0 0.0
    %1145 = vmatpush2.msra.mxu0 0.0
    %1146 = vmatprep.subr.mxu0 0.0
    %1147 = vmatpush2.msra.mxu0 0.0
    %1148 = vmatprep.subr.mxu0 0.0
    %1149 = vmatpush2.msra.mxu0 0.0
    %1150 = vmatprep.subr.mxu0 0.0
    %1151 = vmatpush2.msra.mxu0 0.0
    %1152 = vmatprep.subr.mxu0 0.0
    %1153 = vmatpush2.msra.mxu0 0.0
    %1154 = vmatprep.subr.mxu0 0.0
    %1155 = vmatpush2.msra.mxu0 0.0
    %1156 = vmatprep.subr.mxu0 0.0
    %1157 = vmatpush2.msra.mxu0 0.0
    %1158 = vmatprep.subr.mxu0 0.0
    %1159 = vmatpush2.msra.mxu0 0.0
    %1160 = vmatprep.subr.mxu0 0.0
    %1161 = vmatpush2.msra.mxu0 0.0
    %1162 = vmatprep.subr.mxu0 0.0
    %1163 = vmatpush2.msra.mxu0 0.0
    %1164 = vmatprep.subr.mxu0 0.0
    %1165 = vmatpush2.msra.mxu0 0.0
    %1166 = vmatprep.subr.mxu0 0.0
    %1167 = vmatpush2.msra.mxu0 0.0
    %1168 = vmatprep.subr.mxu0 0.0
    %1169 = vmatpush2.msra.mxu0 0.0
    %1170 = vmatprep.subr.mxu0 0.0
    %1171 = vmatpush2.msra.mxu0 0.0
    %1172 = vmatprep.subr.mxu0 0.0
    %1173 = vmatpush2.msra.mxu0 0.0
    %1174 = vmatprep.subr.mxu0 0.0
    %1175 = vmatpush2.msra.mxu0 0.0
    %1176 = vmatprep.mubr.f32.mxu0 0.0
    %1177 = vmatmul.mubr.f32.gmra.mxu0 %v1089
    %v1178 = vpop.f32.mrf.mxu0
    %v1179 = vadd.f32 0.0, %v1178
    %v1180 = vpop.f32.mrf.mxu0
    %1181 = vmatprep.mubr.f32.mxu0 0.0
    %1182 = vmatmul.mubr.f32.gmra.mxu0 %v1092
    %v1183 = vpop.f32.mrf.mxu0
    %v1184 = vadd.f32 0.0, %v1183
    %v1185 = vpop.f32.mrf.mxu0
    %1186 = vmatprep.mubr.f32.mxu0 0.0
    %1187 = vmatmul.mubr.f32.gmra.mxu0 %v1095
    %v1188 = vpop.f32.mrf.mxu0
    %v1189 = vadd.f32 0.0, %v1188
    %v1190 = vpop.f32.mrf.mxu0
    %1191 = vmatprep.mubr.f32.mxu0 0.0
    %1192 = vmatmul.mubr.f32.gmra.mxu0 %v1098
    %v1193 = vpop.f32.mrf.mxu0
    %v1194 = vadd.f32 0.0, %v1193
    %v1195 = vpop.f32.mrf.mxu0
    %1196 = vmatprep.mubr.f32.mxu0 0.0
    %1197 = vmatmul.mubr.f32.gmra.mxu0 %v1101
    %v1198 = vpop.f32.mrf.mxu0
    %v1199 = vadd.f32 0.0, %v1198
    %v1200 = vpop.f32.mrf.mxu0
    %1201 = vmatprep.mubr.f32.mxu0 0.0
    %1202 = vmatmul.mubr.f32.gmra.mxu0 %v1104
    %v1203 = vpop.f32.mrf.mxu0
    %v1204 = vadd.f32 0.0, %v1203
    %v1205 = vpop.f32.mrf.mxu0
    %1206 = vmatprep.mubr.f32.mxu0 0.0
    %1207 = vmatmul.mubr.f32.gmra.mxu0 %v1107
    %v1208 = vpop.f32.mrf.mxu0
    %v1209 = vadd.f32 0.0, %v1208
    %v1210 = vpop.f32.mrf.mxu0
    %1211 = vmatprep.mubr.f32.mxu0 0.0
    %1212 = vmatmul.mubr.f32.gmra.mxu0 %v1110
    %v1213 = vpop.f32.mrf.mxu0
    %v1214 = vadd.f32 0.0, %v1213
    %v1215 = vpop.f32.mrf.mxu0
    %1216 = vdwg.mxu0
    %v1217 = vmax.f32 %v417, %v798
    %v1218 = vmax.f32 %v422, %v803
    %v1219 = vmax.f32 %v427, %v808
    %v1220 = vmax.f32 %v432, %v813
    %v1221 = vmax.f32 %v437, %v818
    %v1222 = vmax.f32 %v442, %v823
    %v1223 = vmax.f32 %v447, %v828
    %v1224 = vmax.f32 %v452, %v833
    %v1225 = vmax.f32 %v1217, %v1179
    %v1226 = vmax.f32 %v1218, %v1184
    %v1227 = vmax.f32 %v1219, %v1189
    %v1228 = vmax.f32 %v1220, %v1194
    %v1229 = vmax.f32 %v1221, %v1199
    %v1230 = vmax.f32 %v1222, %v1204
    %v1231 = vmax.f32 %v1223, %v1209
    %v1232 = vmax.f32 %v1224, %v1214
    %v1233 = vsub.f32 %v417, %v1225
    %v1234 = vsub.f32 %v422, %v1226
    %v1235 = vsub.f32 %v427, %v1227
    %v1236 = vsub.f32 %v432, %v1228
    %v1237 = vsub.f32 %v437, %v1229
    %v1238 = vsub.f32 %v442, %v1230
    %v1239 = vsub.f32 %v447, %v1231
    %v1240 = vsub.f32 %v452, %v1232
    %v1241 = vmul.f32 %v1233, 1.442695
    %v1242 = vpow.pop %v1241
    %v1243 = vmul.f32 %v1234, 1.442695
    %v1244 = vpow.pop %v1243
    %v1245 = vmul.f32 %v1235, 1.442695
    %v1246 = vpow.pop %v1245
    %v1247 = vmul.f32 %v1236, 1.442695
    %v1248 = vpow.pop %v1247
    %v1249 = vmul.f32 %v1237, 1.442695
    %v1250 = vpow.pop %v1249
    %v1251 = vmul.f32 %v1238, 1.442695
    %v1252 = vpow.pop %v1251
    %v1253 = vmul.f32 %v1239, 1.442695
    %v1254 = vpow.pop %v1253
    %v1255 = vmul.f32 %v1240, 1.442695
    %v1256 = vpow.pop %v1255
    %v1257 = vsub.f32 %v798, %v1225
    %v1258 = vsub.f32 %v803, %v1226
    %v1259 = vsub.f32 %v808, %v1227
    %v1260 = vsub.f32 %v813, %v1228
    %v1261 = vsub.f32 %v818, %v1229
    %v1262 = vsub.f32 %v823, %v1230
    %v1263 = vsub.f32 %v828, %v1231
    %v1264 = vsub.f32 %v833, %v1232
    %v1265 = vmul.f32 %v1257, 1.442695
    %v1266 = vpow.pop %v1265
    %v1267 = vmul.f32 %v1258, 1.442695
    %v1268 = vpow.pop %v1267
    %v1269 = vmul.f32 %v1259, 1.442695
    %v1270 = vpow.pop %v1269
    %v1271 = vmul.f32 %v1260, 1.442695
    %v1272 = vpow.pop %v1271
    %v1273 = vmul.f32 %v1261, 1.442695
    %v1274 = vpow.pop %v1273
    %v1275 = vmul.f32 %v1262, 1.442695
    %v1276 = vpow.pop %v1275
    %v1277 = vmul.f32 %v1263, 1.442695
    %v1278 = vpow.pop %v1277
    %v1279 = vmul.f32 %v1264, 1.442695
    %v1280 = vpow.pop %v1279
    %v1281 = vsub.f32 %v1179, %v1225
    %v1282 = vsub.f32 %v1184, %v1226
    %v1283 = vsub.f32 %v1189, %v1227
    %v1284 = vsub.f32 %v1194, %v1228
    %v1285 = vsub.f32 %v1199, %v1229
    %v1286 = vsub.f32 %v1204, %v1230
    %v1287 = vsub.f32 %v1209, %v1231
    %v1288 = vsub.f32 %v1214, %v1232
    %v1289 = vmul.f32 %v1281, 1.442695
    %v1290 = vpow.pop %v1289
    %v1291 = vmul.f32 %v1282, 1.442695
    %v1292 = vpow.pop %v1291
    %v1293 = vmul.f32 %v1283, 1.442695
    %v1294 = vpow.pop %v1293
    %v1295 = vmul.f32 %v1284, 1.442695
    %v1296 = vpow.pop %v1295
    %v1297 = vmul.f32 %v1285, 1.442695
    %v1298 = vpow.pop %v1297
    %v1299 = vmul.f32 %v1286, 1.442695
    %v1300 = vpow.pop %v1299
    %v1301 = vmul.f32 %v1287, 1.442695
    %v1302 = vpow.pop %v1301
    %v1303 = vmul.f32 %v1288, 1.442695
    %v1304 = vpow.pop %v1303
    %v1305 = vadd.f32 %v1242, %v1266
    %v1306 = vadd.f32 %v1244, %v1268
    %v1307 = vadd.f32 %v1246, %v1270
    %v1308 = vadd.f32 %v1248, %v1272
    %v1309 = vadd.f32 %v1250, %v1274
    %v1310 = vadd.f32 %v1252, %v1276
    %v1311 = vadd.f32 %v1254, %v1278
    %v1312 = vadd.f32 %v1256, %v1280
    %v1313 = vadd.f32 %v1305, %v1290
    %v1314 = vadd.f32 %v1306, %v1292
    %v1315 = vadd.f32 %v1307, %v1294
    %v1316 = vadd.f32 %v1308, %v1296
    %v1317 = vadd.f32 %v1309, %v1298
    %v1318 = vadd.f32 %v1310, %v1300
    %v1319 = vadd.f32 %v1311, %v1302
    %v1320 = vadd.f32 %v1312, %v1304
    %v1321 = vrcp.pop %v1313
    %v1322 = vrcp.pop %v1314
    %v1323 = vrcp.pop %v1315
    %v1324 = vrcp.pop %v1316
    %v1325 = vrcp.pop %v1317
    %v1326 = vrcp.pop %v1318
    %v1327 = vrcp.pop %v1319
    %v1328 = vrcp.pop %v1320
    %v1329 = vmul.f32 %v1242, %v1321
    %v1330 = vmul.f32 %v1244, %v1322
    %v1331 = vmul.f32 %v1246, %v1323
    %v1332 = vmul.f32 %v1248, %v1324
    %v1333 = vmul.f32 %v1250, %v1325
    %v1334 = vmul.f32 %v1252, %v1326
    %v1335 = vmul.f32 %v1254, %v1327
    %v1336 = vmul.f32 %v1256, %v1328
    %1338 = vset.pattern.permute.xlu0 0
    %1339 = vperm.xlu0 %1338, %v1329
    %v1340 = vpop.permute.xlu0 %1339
    %1343 = vset.pattern.permute.xlu0 0
    %1344 = vperm.xlu0 %1343, %v1330
    %v1345 = vpop.permute.xlu0 %1344
    %1348 = vset.pattern.permute.xlu0 0
    %1349 = vperm.xlu0 %1348, %v1331
    %v1350 = vpop.permute.xlu0 %1349
    %1353 = vset.pattern.permute.xlu0 0
    %1354 = vperm.xlu0 %1353, %v1332
    %v1355 = vpop.permute.xlu0 %1354
    %1358 = vset.pattern.permute.xlu0 0
    %1359 = vperm.xlu0 %1358, %v1333
    %v1360 = vpop.permute.xlu0 %1359
    %1363 = vset.pattern.permute.xlu0 0
    %1364 = vperm.xlu0 %1363, %v1334
    %v1365 = vpop.permute.xlu0 %1364
    %1368 = vset.pattern.permute.xlu0 0
    %1369 = vperm.xlu0 %1368, %v1335
    %v1370 = vpop.permute.xlu0 %1369
    %1373 = vset.pattern.permute.xlu0 0
    %1374 = vperm.xlu0 %1373, %v1336
    %v1375 = vpop.permute.xlu0 %1374
    %v1377 = vmul.f32 %v1340, %v279
    %v1378 = vmul.f32 %v1345, %v284
    %v1379 = vmul.f32 %v1350, %v289
    %v1380 = vmul.f32 %v1355, %v294
    %v1381 = vmul.f32 %v1360, %v299
    %v1382 = vmul.f32 %v1365, %v304
    %v1383 = vmul.f32 %v1370, %v309
    %v1384 = vmul.f32 %v1375, %v314
    %v1385 = vadd.f32 %v1377, 0.0
    %v1386 = vadd.f32 %v1378, 0.0
    %v1387 = vadd.f32 %v1379, 0.0
    %v1388 = vadd.f32 %v1380, 0.0
    %v1389 = vadd.f32 %v1381, 0.0
    %v1390 = vadd.f32 %v1382, 0.0
    %v1391 = vadd.f32 %v1383, 0.0
    %v1392 = vadd.f32 %v1384, 0.0
    %v1393 = vmul.f32 %v1266, %v1321
    %v1394 = vmul.f32 %v1268, %v1322
    %v1395 = vmul.f32 %v1270, %v1323
    %v1396 = vmul.f32 %v1272, %v1324
    %v1397 = vmul.f32 %v1274, %v1325
    %v1398 = vmul.f32 %v1276, %v1326
    %v1399 = vmul.f32 %v1278, %v1327
    %v1400 = vmul.f32 %v1280, %v1328
    %1402 = vset.pattern.permute.xlu0 0
    %1403 = vperm.xlu0 %1402, %v1393
    %v1404 = vpop.permute.xlu0 %1403
    %1407 = vset.pattern.permute.xlu0 0
    %1408 = vperm.xlu0 %1407, %v1394
    %v1409 = vpop.permute.xlu0 %1408
    %1412 = vset.pattern.permute.xlu0 0
    %1413 = vperm.xlu0 %1412, %v1395
    %v1414 = vpop.permute.xlu0 %1413
    %1417 = vset.pattern.permute.xlu0 0
    %1418 = vperm.xlu0 %1417, %v1396
    %v1419 = vpop.permute.xlu0 %1418
    %1422 = vset.pattern.permute.xlu0 0
    %1423 = vperm.xlu0 %1422, %v1397
    %v1424 = vpop.permute.xlu0 %1423
    %1427 = vset.pattern.permute.xlu0 0
    %1428 = vperm.xlu0 %1427, %v1398
    %v1429 = vpop.permute.xlu0 %1428
    %1432 = vset.pattern.permute.xlu0 0
    %1433 = vperm.xlu0 %1432, %v1399
    %v1434 = vpop.permute.xlu0 %1433
    %1437 = vset.pattern.permute.xlu0 0
    %1438 = vperm.xlu0 %1437, %v1400
    %v1439 = vpop.permute.xlu0 %1438
    %v1441 = vmul.f32 %v1404, %v660
    %v1442 = vmul.f32 %v1409, %v665
    %v1443 = vmul.f32 %v1414, %v670
    %v1444 = vmul.f32 %v1419, %v675
    %v1445 = vmul.f32 %v1424, %v680
    %v1446 = vmul.f32 %v1429, %v685
    %v1447 = vmul.f32 %v1434, %v690
    %v1448 = vmul.f32 %v1439, %v695
    %v1449 = vadd.f32 %v1385, %v1441
    %v1450 = vadd.f32 %v1386, %v1442
    %v1451 = vadd.f32 %v1387, %v1443
    %v1452 = vadd.f32 %v1388, %v1444
    %v1453 = vadd.f32 %v1389, %v1445
    %v1454 = vadd.f32 %v1390, %v1446
    %v1455 = vadd.f32 %v1391, %v1447
    %v1456 = vadd.f32 %v1392, %v1448
    %v1457 = vmul.f32 %v1290, %v1321
    %v1458 = vmul.f32 %v1292, %v1322
    %v1459 = vmul.f32 %v1294, %v1323
    %v1460 = vmul.f32 %v1296, %v1324
    %v1461 = vmul.f32 %v1298, %v1325
    %v1462 = vmul.f32 %v1300, %v1326
    %v1463 = vmul.f32 %v1302, %v1327
    %v1464 = vmul.f32 %v1304, %v1328
    %1466 = vset.pattern.permute.xlu0 0
    %1467 = vperm.xlu0 %1466, %v1457
    %v1468 = vpop.permute.xlu0 %1467
    %1471 = vset.pattern.permute.xlu0 0
    %1472 = vperm.xlu0 %1471, %v1458
    %v1473 = vpop.permute.xlu0 %1472
    %1476 = vset.pattern.permute.xlu0 0
    %1477 = vperm.xlu0 %1476, %v1459
    %v1478 = vpop.permute.xlu0 %1477
    %1481 = vset.pattern.permute.xlu0 0
    %1482 = vperm.xlu0 %1481, %v1460
    %v1483 = vpop.permute.xlu0 %1482
    %1486 = vset.pattern.permute.xlu0 0
    %1487 = vperm.xlu0 %1486, %v1461
    %v1488 = vpop.permute.xlu0 %1487
    %1491 = vset.pattern.permute.xlu0 0
    %1492 = vperm.xlu0 %1491, %v1462
    %v1493 = vpop.permute.xlu0 %1492
    %1496 = vset.pattern.permute.xlu0 0
    %1497 = vperm.xlu0 %1496, %v1463
    %v1498 = vpop.permute.xlu0 %1497
    %1501 = vset.pattern.permute.xlu0 0
    %1502 = vperm.xlu0 %1501, %v1464
    %v1503 = vpop.permute.xlu0 %1502
    %v1505 = vmul.f32 %v1468, %v1041
    %v1506 = vmul.f32 %v1473, %v1046
    %v1507 = vmul.f32 %v1478, %v1051
    %v1508 = vmul.f32 %v1483, %v1056
    %v1509 = vmul.f32 %v1488, %v1061
    %v1510 = vmul.f32 %v1493, %v1066
    %v1511 = vmul.f32 %v1498, %v1071
    %v1512 = vmul.f32 %v1503, %v1076
    %v1513 = vadd.f32 %v1449, %v1505
    %v1514 = vadd.f32 %v1450, %v1506
    %v1515 = vadd.f32 %v1451, %v1507
    %v1516 = vadd.f32 %v1452, %v1508
    %v1517 = vadd.f32 %v1453, %v1509
    %v1518 = vadd.f32 %v1454, %v1510
    %v1519 = vadd.f32 %v1455, %v1511
    %v1520 = vadd.f32 %v1456, %v1512
    %1521 = vst.msk [vmem:[#allocation2] sm:$0xff] %vm317, %v1513
    %1522 = vst.msk [vmem:[#allocation2 + $0x8] sm:$0xff] %vm317, %v1514
    %1523 = vst.msk [vmem:[#allocation2 + $0x10] sm:$0xff] %vm317, %v1515
    %1524 = vst.msk [vmem:[#allocation2 + $0x18] sm:$0xff] %vm317, %v1516
    %1525 = vst.msk [vmem:[#allocation2 + $0x20] sm:$0xff] %vm317, %v1517
    %1526 = vst.msk [vmem:[#allocation2 + $0x28] sm:$0xff] %vm317, %v1518
    %1527 = vst.msk [vmem:[#allocation2 + $0x30] sm:$0xff] %vm317, %v1519
    %1528 = vst.msk [vmem:[#allocation2 + $0x38] sm:$0xff] %vm317, %v1520
    %s1529 = sld [smem:[#allocation3]]
    %s1530 = sld [smem:[#allocation7]]
    %s1531 = scalar_lea.vmem [#allocation2], %s1529
    %v1532 = vld [vmem:[%s1531] sm:$0x1]
    %s1533 = scalar_lea.vmem [#allocation2], %s1530
    %v1534 = vld [vmem:[%s1533] sm:$0x1]
    %v1535 = vmul.f32 %v1532, %v1534
    %vm1536 = vcmask 253952
    %1537 = vst.msk [vmem:[#allocation10] sm:$0x1] %vm1536, %v1535
    %s1538 = sld [smem:[#allocation3 + $0x1]]
    %s1539 = sld [smem:[#allocation7 + $0x1]]
    %s1540 = scalar_lea.vmem [#allocation2], %s1538
    %v1541 = vld [vmem:[%s1540] sm:$0x1]
    %s1542 = scalar_lea.vmem [#allocation2], %s1539
    %v1543 = vld [vmem:[%s1542] sm:$0x1]
    %v1544 = vmul.f32 %v1541, %v1543
    %1545 = vst.msk [vmem:[#allocation10 + $0x1] sm:$0x1] %vm1536, %v1544
    %s1546 = sld [smem:[#allocation3 + $0x2]]
    %s1547 = sld [smem:[#allocation7 + $0x2]]
    %s1548 = scalar_lea.vmem [#allocation2], %s1546
    %v1549 = vld [vmem:[%s1548] sm:$0x1]
    %s1550 = scalar_lea.vmem [#allocation2], %s1547
    %v1551 = vld [vmem:[%s1550] sm:$0x1]
    %v1552 = vmul.f32 %v1549, %v1551
    %1553 = vst.msk [vmem:[#allocation10 + $0x2] sm:$0x1] %vm1536, %v1552
    %s1554 = sld [smem:[#allocation3 + $0x3]]
    %s1555 = sld [smem:[#allocation7 + $0x3]]
    %s1556 = scalar_lea.vmem [#allocation2], %s1554
    %v1557 = vld [vmem:[%s1556] sm:$0x1]
    %s1558 = scalar_lea.vmem [#allocation2], %s1555
    %v1559 = vld [vmem:[%s1558] sm:$0x1]
    %v1560 = vmul.f32 %v1557, %v1559
    %1561 = vst.msk [vmem:[#allocation10 + $0x3] sm:$0x1] %vm1536, %v1560
    %s1562 = sld [smem:[#allocation3 + $0x4]]
    %s1563 = sld [smem:[#allocation7 + $0x4]]
    %s1564 = scalar_lea.vmem [#allocation2], %s1562
    %v1565 = vld [vmem:[%s1564] sm:$0x1]
    %s1566 = scalar_lea.vmem [#allocation2], %s1563
    %v1567 = vld [vmem:[%s1566] sm:$0x1]
    %v1568 = vmul.f32 %v1565, %v1567
    %1569 = vst.msk [vmem:[#allocation10 + $0x4] sm:$0x1] %vm1536, %v1568
    %s1570 = sld [smem:[#allocation3 + $0x5]]
    %s1571 = sld [smem:[#allocation7 + $0x5]]
    %s1572 = scalar_lea.vmem [#allocation2], %s1570
    %v1573 = vld [vmem:[%s1572] sm:$0x1]
    %s1574 = scalar_lea.vmem [#allocation2], %s1571
    %v1575 = vld [vmem:[%s1574] sm:$0x1]
    %v1576 = vmul.f32 %v1573, %v1575
    %1577 = vst.msk [vmem:[#allocation10 + $0x5] sm:$0x1] %vm1536, %v1576
    %s1578 = sld [smem:[#allocation3 + $0x6]]
    %s1579 = sld [smem:[#allocation7 + $0x6]]
    %s1580 = scalar_lea.vmem [#allocation2], %s1578
    %v1581 = vld [vmem:[%s1580] sm:$0x1]
    %s1582 = scalar_lea.vmem [#allocation2], %s1579
    %v1583 = vld [vmem:[%s1582] sm:$0x1]
    %v1584 = vmul.f32 %v1581, %v1583
    %1585 = vst.msk [vmem:[#allocation10 + $0x6] sm:$0x1] %vm1536, %v1584
    %s1586 = sld [smem:[#allocation3 + $0x7]]
    %s1587 = sld [smem:[#allocation7 + $0x7]]
    %s1588 = scalar_lea.vmem [#allocation2], %s1586
    %v1589 = vld [vmem:[%s1588] sm:$0x1]
    %s1590 = scalar_lea.vmem [#allocation2], %s1587
    %v1591 = vld [vmem:[%s1590] sm:$0x1]
    %v1592 = vmul.f32 %v1589, %v1591
    %1593 = vst.msk [vmem:[#allocation10 + $0x7] sm:$0x1] %vm1536, %v1592
    // Predicated region
    $region34: #{tpu_custom_call.1} parent=1 // pred_check
      _
    $region35: #{tpu_custom_call.1} parent=1 // pred_check_branch
      %1595 = sbr.rel (0) target = $region37
    $region36: #{tpu_custom_call.1} parent=1 // pred_region
      _
    $region37: #{tpu_custom_call.1} parent=1 // pred_fallthru
      _
    // Predicated region
    $region38: #{tpu_custom_call.1} parent=1 // pred_check
      _
    $region39: #{tpu_custom_call.1} parent=1 // pred_check_branch
      %1597 = sbr.rel (0) target = $region41
    $region40: #{tpu_custom_call.1} parent=1 // pred_region
      %s1599 = ssub.s32 128, 128
      %1600 = vsyncadd [#allocation5], %s1599
      %s1602 = sshll.u32 [#allocation10], 4
      %s1603 = int_to_ptr.vmem [resolvable:$true] %s1602
      %1605 = dma.vmem_to_hbm [thread:$0]  %s1603, 128, %s6, [#allocation5]
    $region41: #{tpu_custom_call.1} parent=1 // pred_fallthru
      _
    // Predicated region
    $region42: #{tpu_custom_call.1} parent=1 // pred_check
      _
    $region43: #{tpu_custom_call.1} parent=1 // pred_check_branch
      %1607 = sbr.rel (0) target = $region45
    $region44: #{tpu_custom_call.1} parent=1 // pred_region
      _
    $region45: #{tpu_custom_call.1} parent=1 // pred_fallthru
      _
    // Predicated region
    $region46: #{tpu_custom_call.1} parent=1 // pred_check
      _
    $region47: #{tpu_custom_call.1} parent=1 // pred_check_branch
      %1609 = sbr.rel (0) target = $region49
    $region48: #{tpu_custom_call.1} parent=1 // pred_region
      %1610 = dma.done [#allocation5], 128
    $region49: #{tpu_custom_call.1} parent=1 // pred_fallthru
      _
    %1611 = vsyncpa [#allocation4], 1
    %1612 = vsyncpa [#allocation5], 1
    %1613 = vsyncpa [#allocation6], 1
    %1614 = vsyncpa [#allocation8], 1

</llo_original>
